<compile_context>
chip_gen: v7x
topology: tpu7x:2x2x1
jax: 0.10.0
libtpu: 0.0.40
codegen_flags: <defaults>
</compile_context>

<pallas_src>
import functools

import jax
import jax.numpy as jnp
from jax import lax
from jax.experimental import pallas as pl
from jax.experimental.pallas import tpu as pltpu

VAR_EPS = 1e-4
CLAMP_MAX = 12.0
LANE = 128
NEG_FILL = -1e30  # bias fill for padded softmax lanes -> exp() == 0


def _round_up(n, m):
    return (n + m - 1) // m * m


def _zinb_decoder_kernel(
    # inputs ------------------------------------------------------------
    x_ref,      # (TB, in_dim)   f32
    w1_ref,     # (in_dim, H)    bf16
    b1_ref,     # (1, H)         f32
    ws_ref,     # (H, TN)        bf16  scale head, tile j (streamed both phases)
    bs_ref,     # (1, TN)        f32   (-1e30 in padded lanes)
    wrd_ref,    # (2, H, TN)     bf16  [r, dropout] heads, tile j (phase 0 only)
    brd_ref,    # (2, 1, TN)     f32
    wlib_ref,   # (H, LANE)      bf16  lanes 0/1 = library mean / log-var heads
    blib_ref,   # (1, LANE)      f32
    noise_ref,  # (TB, 1)        f32   N(0,1) eps for rsample
    # outputs -----------------------------------------------------------
    out_sr_ref,   # (2, TB, TN)  f32  [px_scale, px_rate]  (written in phase 1)
    out_rd_ref,   # (2, TB, TN)  f32  [px_r, px_dropout]   (written in phase 0)
    out_lib_ref,  # (TB, LANE)   f32  lanes 0/1/2 = mean / var / library
    # scratch (persist across the whole per-batch-tile phase0+phase1 sweep)
    px_sc,        # (TB, H)  bf16  ReLU hidden activations
    rate_sc,      # (TB, 1)  f32   n_cells * exp(library)
    m_sc,         # (TB, 1)  f32   running row-max of scale logits
    l_sc,         # (TB, 1)  f32   running row sum-exp
    *,
    n_cells,            # static python float
    use_library_mean,   # static python bool
):
    ph = pl.program_id(1)   # softmax phase: 0 = stats, 1 = normalize & write
    j = pl.program_id(2)    # N (out_dim) tile index

    # ---- once per batch tile: hidden layer, library heads, stat init -------
    @pl.when(jnp.logical_and(ph == 0, j == 0))
    def _():
        px = jnp.dot(x_ref[...].astype(jnp.bfloat16), w1_ref[...],
                     preferred_element_type=jnp.float32) + b1_ref[...]
        px_b = jnp.maximum(px, 0.0).astype(jnp.bfloat16)
        px_sc[...] = px_b

        lib = jnp.dot(px_b, wlib_ref[...],
                      preferred_element_type=jnp.float32) + blib_ref[...]
        tb = lib.shape[0]
        lane = lax.broadcasted_iota(jnp.int32, (tb, LANE), 1)
        lib_mean = jnp.sum(jnp.where(lane == 0, lib, 0.0), axis=-1, keepdims=True)
        lib_logv = jnp.sum(jnp.where(lane == 1, lib, 0.0), axis=-1, keepdims=True)
        lib_var = jnp.exp(lib_logv) + VAR_EPS
        # Normal(mean, sqrt(var)).rsample() == mean + sqrt(var) * eps
        log_library = lib_mean + jnp.sqrt(lib_var) * noise_ref[...]
        if use_library_mean:
            log_library = lib_mean
        rate_sc[...] = n_cells * jnp.exp(log_library)
        out_lib_ref[...] = (jnp.where(lane == 0, lib_mean, 0.0)
                            + jnp.where(lane == 1, lib_var, 0.0)
                            + jnp.where(lane == 2, log_library, 0.0))

        m_sc[...] = jnp.full_like(m_sc, NEG_FILL)
        l_sc[...] = jnp.zeros_like(l_sc)

    px_b = px_sc[...]

    # ---- phase 0: online softmax statistics + r / dropout heads ------------
    @pl.when(ph == 0)
    def _():
        logits = jnp.dot(px_b, ws_ref[...],
                         preferred_element_type=jnp.float32) + bs_ref[...]
        m_old = m_sc[...]
        m_new = jnp.maximum(m_old, jnp.max(logits, axis=-1, keepdims=True))
        l_sc[...] = (l_sc[...] * jnp.exp(m_old - m_new)
                     + jnp.sum(jnp.exp(logits - m_new), axis=-1, keepdims=True))
        m_sc[...] = m_new

        r_logit = jnp.dot(px_b, wrd_ref[0],
                          preferred_element_type=jnp.float32) + brd_ref[0]
        d_logit = jnp.dot(px_b, wrd_ref[1],
                          preferred_element_type=jnp.float32) + brd_ref[1]
        out_rd_ref[0] = jnp.exp(jnp.minimum(r_logit, CLAMP_MAX))
        out_rd_ref[1] = d_logit

    # ---- phase 1: recompute scale logits, normalize, write scale & rate ----
    @pl.when(ph == 1)
    def _():
        logits = jnp.dot(px_b, ws_ref[...],
                         preferred_element_type=jnp.float32) + bs_ref[...]
        inv_den = pl.reciprocal(l_sc[...], approx=True)   # EUP slot
        px_scale = jnp.exp(logits - m_sc[...]) * inv_den
        out_sr_ref[0] = px_scale
        out_sr_ref[1] = rate_sc[...] * px_scale


def pack_params(p, tn=512):
    """Pad / restack the head parameters for the tiled kernel (one-time setup).

    tn: lane tile width over out_dim (multiple of 128).  SEG = round_up(out_dim, tn).
    Weights are stored bf16 (MXU operands); biases stay f32.  Padded bias lanes of
    the scale head are filled with -1e30 so the in-kernel softmax needs no masking.
    """
    hidden, out_dim = p["ws"].shape
    tn = min(_round_up(tn, LANE), _round_up(out_dim, LANE))
    seg = _round_up(out_dim, tn)
    bf16 = jnp.bfloat16

    def pad_w(w, width):
        return jnp.pad(w, ((0, 0), (0, width - w.shape[1]))).astype(bf16)

    def pad_b(b, width, fill=0.0):
        return jnp.pad(b, ((0, 0), (0, width - b.shape[1])),
                       constant_values=fill).astype(jnp.float32)

    w_lib = jnp.concatenate([p["wm"], p["wv"]], axis=1)   # (H, 2)
    b_lib = jnp.concatenate([p["bm"], p["bv"]], axis=1)   # (1, 2)

    return dict(
        w1=p["w1"].astype(bf16), b1=p["b1"].astype(jnp.float32),
        ws=pad_w(p["ws"], seg), bs=pad_b(p["bs"], seg, fill=NEG_FILL),
        wrd=jnp.stack([pad_w(p["wr"], seg), pad_w(p["wd"], seg)], axis=0),
        brd=jnp.stack([pad_b(p["br"], seg), pad_b(p["bd"], seg)], axis=0),
        wlib=pad_w(w_lib, LANE), blib=pad_b(b_lib, LANE),
        out_dim=out_dim, hidden=hidden, seg=seg, tn=tn,
    )


def zinb_decoder(x, packed, noise, n_cells=1.0, use_library_mean=False, tb=128):
    """x: (B, in_dim) f32. packed: output of pack_params. noise: (B, 1) f32 N(0,1).

    tb: batch tile (multiple of 8; use 128-256 for real workloads so the MXU rows
    fill).  tn (lane tile) is fixed at pack_params time; on v7x (64 MiB VMEM) keep
    H*tn*2B double-buffered well under the limit (tn ~ 1024-2048 for H=128-256).
    """
    B, in_dim = x.shape
    hidden, out_dim = packed["hidden"], packed["out_dim"]
    seg, tn = packed["seg"], packed["tn"]
    nj = seg // tn

    tb = min(_round_up(tb, 8), _round_up(B, 8))
    b_pad = _round_up(B, tb)
    nb = b_pad // tb

    x_p = jnp.pad(x, ((0, b_pad - B), (0, 0))).astype(jnp.float32)
    noise_p = jnp.pad(noise, ((0, b_pad - B), (0, 0))).astype(jnp.float32)
    f32 = jnp.float32

    kernel = functools.partial(
        _zinb_decoder_kernel, n_cells=float(n_cells),
        use_library_mean=bool(use_library_mean))

    # r/dropout weights & outputs: stream tiles in phase 0, freeze the block
    # index during phase 1 (no re-DMA, no re-write of already-written blocks).
    def rd_idx(bi, ph, j):
        return (0, 0, j * (1 - ph) + (nj - 1) * ph)

    in_specs = [
        pl.BlockSpec((tb, in_dim), lambda bi, ph, j: (bi, 0)),       # x
        pl.BlockSpec((in_dim, hidden), lambda bi, ph, j: (0, 0)),    # w1
        pl.BlockSpec((1, hidden), lambda bi, ph, j: (0, 0)),         # b1
        pl.BlockSpec((hidden, tn), lambda bi, ph, j: (0, j)),        # ws (both phases)
        pl.BlockSpec((1, tn), lambda bi, ph, j: (0, j)),             # bs
        pl.BlockSpec((2, hidden, tn), rd_idx),                       # wrd (phase 0)
        pl.BlockSpec((2, 1, tn), rd_idx),                            # brd
        pl.BlockSpec((hidden, LANE), lambda bi, ph, j: (0, 0)),      # wlib
        pl.BlockSpec((1, LANE), lambda bi, ph, j: (0, 0)),           # blib
        pl.BlockSpec((tb, 1), lambda bi, ph, j: (bi, 0)),            # noise
    ]
    out_specs = [
        # [px_scale, px_rate]: held at tile 0 during phase 0, streamed in phase 1.
        pl.BlockSpec((2, tb, tn), lambda bi, ph, j: (0, bi, j * ph)),
        # [px_r, px_dropout]: streamed in phase 0, frozen at last tile in phase 1.
        pl.BlockSpec((2, tb, tn),
                     lambda bi, ph, j: (0, bi, j * (1 - ph) + (nj - 1) * ph)),
        # library stats (mean / var / library in lanes 0/1/2): resident per batch tile.
        pl.BlockSpec((tb, LANE), lambda bi, ph, j: (bi, 0)),
    ]
    out_shape = (
        jax.ShapeDtypeStruct((2, b_pad, seg), f32),
        jax.ShapeDtypeStruct((2, b_pad, seg), f32),
        jax.ShapeDtypeStruct((b_pad, LANE), f32),
    )
    scratch_shapes = [
        pltpu.VMEM((tb, hidden), jnp.bfloat16),   # px (ReLU hidden), reused across tiles
        pltpu.VMEM((tb, 1), f32),                 # n_cells * exp(library)
        pltpu.VMEM((tb, 1), f32),                 # running max
        pltpu.VMEM((tb, 1), f32),                 # running sum-exp
    ]

    # Advisory cost estimate (scale head matmul runs in both phases).
    flops = 2 * b_pad * (in_dim * hidden + hidden * (4 * seg + LANE))
    transcendentals = b_pad * (3 * seg + 4)
    bytes_accessed = (
        x_p.size * 4 + noise_p.size * 4
        + packed["w1"].size * 2 + packed["b1"].size * 4
        + 2 * nb * packed["ws"].size * 2 + 2 * nb * packed["bs"].size * 4
        + nb * packed["wrd"].size * 2 + nb * packed["brd"].size * 4
        + packed["wlib"].size * 2 + packed["blib"].size * 4
        + (4 * b_pad * seg + b_pad * LANE) * 4)

    out_sr, out_rd, out_lib = pl.pallas_call(
        kernel,
        out_shape=out_shape,
        grid_spec=pltpu.PrefetchScalarGridSpec(
            num_scalar_prefetch=0,
            grid=(nb, 2, nj),
            in_specs=in_specs,
            out_specs=out_specs,
            scratch_shapes=scratch_shapes,
        ),
        compiler_params=pltpu.CompilerParams(
            # batch tiles are independent -> sharded across the 2 TCs on v7x
            dimension_semantics=("parallel", "arbitrary", "arbitrary"),
            vmem_limit_bytes=48 * 1024 * 1024,
        ),
        cost_estimate=pl.CostEstimate(
            flops=int(flops), transcendentals=int(transcendentals),
            bytes_accessed=int(bytes_accessed)),
    )(x_p, packed["w1"], packed["b1"], packed["ws"], packed["bs"],
      packed["wrd"], packed["brd"], packed["wlib"], packed["blib"], noise_p)

    return {
        "px_scale": out_sr[0, :B, :out_dim],
        "px_r": out_rd[0, :B, :out_dim],
        "px_rate": out_sr[1, :B, :out_dim],
        "px_dropout": out_rd[1, :B, :out_dim],
        "library_mean": out_lib[:B, 0:1],
        "library_var": out_lib[:B, 1:2],
        "library": out_lib[:B, 2:3],
        "gene_likelihood": "zinb",
    }


def init_params(key, in_dim, out_dim, hidden_dim):
    """nn.Linear-default init: U(-1/sqrt(fan_in), 1/sqrt(fan_in)).
    Weights stored as (fan_in, fan_out); biases as (1, fan_out)."""
    ks = jax.random.split(key, 12)

    def lin(kw, kb, fan_in, fan_out):
        bound = 1.0 / jnp.sqrt(fan_in)
        w = jax.random.uniform(kw, (fan_in, fan_out), jnp.float32, -bound, bound)
        b = jax.random.uniform(kb, (1, fan_out), jnp.float32, -bound, bound)
        return w, b

    w1, b1 = lin(ks[0], ks[1], in_dim, hidden_dim)
    ws, bs = lin(ks[2], ks[3], hidden_dim, out_dim)   # px_scale head
    wr, br = lin(ks[4], ks[5], hidden_dim, out_dim)   # px_r head
    wd, bd = lin(ks[6], ks[7], hidden_dim, out_dim)   # px_dropout head
    wm, bm = lin(ks[8], ks[9], hidden_dim, 1)         # library mean head
    wv, bv = lin(ks[10], ks[11], hidden_dim, 1)       # library log-var head
    return dict(w1=w1, b1=b1, ws=ws, bs=bs, wr=wr, br=br,
                wd=wd, bd=bd, wm=wm, bm=bm, wv=wv, bv=bv)


def _reference(x, p, noise, n_cells=1.0, use_library_mean=False):
    """Pure-JAX reference of the PyTorch forward (log_library=None path), with the
    same bf16 rounding of matmul operands the kernel uses (f32 accumulation)."""
    bf = lambda a: a.astype(jnp.bfloat16).astype(jnp.float32)
    xb = bf(x)
    px = jnp.maximum(xb @ bf(p["w1"]) + p["b1"], 0.0)
    pxb = bf(px)
    lm = pxb @ bf(p["wm"]) + p["bm"]
    lv = jnp.exp(pxb @ bf(p["wv"]) + p["bv"]) + VAR_EPS
    log_lib = lm + jnp.sqrt(lv) * noise
    if use_library_mean:
        log_lib = lm
    px_scale = jax.nn.softmax(pxb @ bf(p["ws"]) + p["bs"], axis=-1)
    px_dropout = pxb @ bf(p["wd"]) + p["bd"]
    px_r = jnp.exp(jnp.minimum(pxb @ bf(p["wr"]) + p["br"], CLAMP_MAX))
    px_rate = n_cells * jnp.exp(log_lib) * px_scale
    return {
        "px_scale": px_scale, "px_r": px_r, "px_rate": px_rate,
        "px_dropout": px_dropout, "library_mean": lm, "library_var": lv,
        "library": log_lib,
    }


if __name__ == "__main__":
    # Small shapes, but chosen to exercise the grid: 2 batch tiles x 2 phases x
    # 2 out_dim tiles (out_dim=200 -> SEG=256 with tn=128).
    B, IN_DIM, OUT_DIM, HIDDEN = 16, 32, 200, 128

    key = jax.random.PRNGKey(0)
    k_x, k_p, k_n = jax.random.split(key, 3)

    x = jax.random.normal(k_x, (B, IN_DIM), dtype=jnp.float32)
    params = init_params(k_p, IN_DIM, OUT_DIM, HIDDEN)
    noise = jax.random.normal(k_n, (B, 1), dtype=jnp.float32)   # eps for rsample

    packed = pack_params(params, tn=128)   # one-time host-side padding / bf16 cast

    out = zinb_decoder(x, packed, noise, n_cells=1.0, use_library_mean=False, tb=8)
    jax.block_until_ready(out["px_rate"])

    # Correctness vs. bf16-matched pure-JAX reference.  Residual error sources:
    # approx reciprocal in the softmax (~2^-12 rel) and MXU accumulation order.
    ref = _reference(x, params, noise)
    for name in ["px_scale", "px_r", "px_rate", "px_dropout",
                 "library_mean", "library_var", "library"]:
        assert out[name].shape == ref[name].shape, name
        assert jnp.allclose(out[name], ref[name], atol=3e-3, rtol=3e-3), name

    print("KERNEL_OK")
</pallas_src>

<mosaic_0001>
module attributes {stable_mosaic.version = 11 : i64} {
  func.func @_zinb_decoder_kernel(%arg0: i32, %arg1: i32, %arg2: i32, %arg3: memref<8x32xf32, #tpu.memory_space<vmem>>, %arg4: memref<32x128xbf16, #tpu.memory_space<vmem>>, %arg5: memref<1x128xf32, #tpu.memory_space<vmem>>, %arg6: memref<128x128xbf16, #tpu.memory_space<vmem>>, %arg7: memref<1x128xf32, #tpu.memory_space<vmem>>, %arg8: memref<2x128x128xbf16, #tpu.memory_space<vmem>>, %arg9: memref<2x1x128xf32, #tpu.memory_space<vmem>>, %arg10: memref<128x128xbf16, #tpu.memory_space<vmem>>, %arg11: memref<1x128xf32, #tpu.memory_space<vmem>>, %arg12: memref<8x1xf32, #tpu.memory_space<vmem>>, %arg13: memref<2x8x128xf32, #tpu.memory_space<vmem>>, %arg14: memref<2x8x128xf32, #tpu.memory_space<vmem>>, %arg15: memref<8x128xf32, #tpu.memory_space<vmem>>, %arg16: memref<8x128xbf16, #tpu.memory_space<vmem>>, %arg17: memref<8x1xf32, #tpu.memory_space<vmem>>, %arg18: memref<8x1xf32, #tpu.memory_space<vmem>>, %arg19: memref<8x1xf32, #tpu.memory_space<vmem>>) attributes {dimension_semantics = [#tpu.dimension_semantics<parallel>, #tpu.dimension_semantics<arbitrary>, #tpu.dimension_semantics<arbitrary>], iteration_bounds = array<i64: 2, 2, 2>, scalar_prefetch = 0 : i64, scratch_operands = 4 : i64, tpu.core_type = #tpu.core_type<tc>, window_params = [{transform_indices = @transform_0, window_bounds = array<i64: 8, 32>}, {pipeline_mode = #tpu.pipeline_mode<synchronous>, transform_indices = @transform_1, window_bounds = array<i64: 32, 128>}, {pipeline_mode = #tpu.pipeline_mode<synchronous>, transform_indices = @transform_2, window_bounds = array<i64: 1, 128>}, {transform_indices = @transform_3, window_bounds = array<i64: 128, 128>}, {transform_indices = @transform_4, window_bounds = array<i64: 1, 128>}, {transform_indices = @transform_5, window_bounds = array<i64: 2, 128, 128>}, {transform_indices = @transform_6, window_bounds = array<i64: 2, 1, 128>}, {pipeline_mode = #tpu.pipeline_mode<synchronous>, transform_indices = @transform_7, window_bounds = array<i64: 128, 128>}, {pipeline_mode = #tpu.pipeline_mode<synchronous>, transform_indices = @transform_8, window_bounds = array<i64: 1, 128>}, {transform_indices = @transform_9, window_bounds = array<i64: 8, 1>}, {transform_indices = @transform_10, window_bounds = array<i64: 2, 8, 128>}, {transform_indices = @transform_11, window_bounds = array<i64: 2, 8, 128>}, {transform_indices = @transform_12, window_bounds = array<i64: 8, 128>}]} {
    %c0_i32 = arith.constant 0 : i32
    %0 = arith.cmpi eq, %arg1, %c0_i32 : i32
    %c0_i32_0 = arith.constant 0 : i32
    %1 = arith.cmpi eq, %arg2, %c0_i32_0 : i32
    %2 = arith.andi %0, %1 : i1
    %3 = arith.extui %2 : i1 to i32
    %c0_i32_1 = arith.constant 0 : i32
    %4 = arith.cmpi ne, %3, %c0_i32_1 : i32
    scf.if %4 {
      %c0_6 = arith.constant 0 : index
      %c0_7 = arith.constant 0 : index
      %12 = vector.load %arg3[%c0_6, %c0_7] : memref<8x32xf32, #tpu.memory_space<vmem>>, vector<8x32xf32>
      %13 = arith.truncf %12 : vector<8x32xf32> to vector<8x32xbf16>
      %c0_8 = arith.constant 0 : index
      %c0_9 = arith.constant 0 : index
      %14 = vector.load %arg4[%c0_8, %c0_9] : memref<32x128xbf16, #tpu.memory_space<vmem>>, vector<32x128xbf16>
      %cst = arith.constant dense<0.000000e+00> : vector<8x128xf32>
      %15 = tpu.matmul %13, %14, %cst {dimension_numbers = #tpu.dot_dimension_numbers<[1], [0], [0], [1], [0, 0, 1, 1], [], []>} : vector<8x32xbf16>, vector<32x128xbf16>, vector<8x128xf32> -> vector<8x128xf32>
      %c0_10 = arith.constant 0 : index
      %c0_11 = arith.constant 0 : index
      %16 = vector.load %arg5[%c0_10, %c0_11] : memref<1x128xf32, #tpu.memory_space<vmem>>, vector<1x128xf32>
      %17 = vector.broadcast %16 : vector<1x128xf32> to vector<8x128xf32>
      %18 = arith.addf %15, %17 : vector<8x128xf32>
      %cst_12 = arith.constant 0.000000e+00 : f32
      %19 = vector.broadcast %cst_12 : f32 to vector<8x128xf32>
      %20 = arith.maximumf %18, %19 : vector<8x128xf32>
      %21 = arith.truncf %20 : vector<8x128xf32> to vector<8x128xbf16>
      %c0_13 = arith.constant 0 : index
      %c0_14 = arith.constant 0 : index
      %22 = vector.load %arg16[%c0_13, %c0_14] : memref<8x128xbf16, #tpu.memory_space<vmem>>, vector<8x128xbf16>
      tpu.vector_store %arg16[%c0_13, %c0_14], %21 {strides = array<i32>} : memref<8x128xbf16, #tpu.memory_space<vmem>>, vector<8x128xbf16>,
      %c0_15 = arith.constant 0 : index
      %c0_16 = arith.constant 0 : index
      %23 = vector.load %arg10[%c0_15, %c0_16] : memref<128x128xbf16, #tpu.memory_space<vmem>>, vector<128x128xbf16>
      %cst_17 = arith.constant dense<0.000000e+00> : vector<8x128xf32>
      %24 = tpu.matmul %21, %23, %cst_17 {dimension_numbers = #tpu.dot_dimension_numbers<[1], [0], [0], [1], [0, 0, 1, 1], [], []>} : vector<8x128xbf16>, vector<128x128xbf16>, vector<8x128xf32> -> vector<8x128xf32>
      %c0_18 = arith.constant 0 : index
      %c0_19 = arith.constant 0 : index
      %25 = vector.load %arg11[%c0_18, %c0_19] : memref<1x128xf32, #tpu.memory_space<vmem>>, vector<1x128xf32>
      %26 = vector.broadcast %25 : vector<1x128xf32> to vector<8x128xf32>
      %27 = arith.addf %24, %26 : vector<8x128xf32>
      %28 = tpu.iota {dimensions = array<i32: 1>} : vector<8x128xi32>
      %c0_i32_20 = arith.constant 0 : i32
      %29 = vector.broadcast %c0_i32_20 : i32 to vector<8x128xi32>
      %30 = arith.cmpi eq, %28, %29 : vector<8x128xi32>
      %cst_21 = arith.constant 0.000000e+00 : f32
      %31 = vector.broadcast %cst_21 : f32 to vector<8x128xf32>
      %32 = arith.select %30, %27, %31 : vector<8x128xi1>, vector<8x128xf32>
      %cst_22 = arith.constant dense<0.000000e+00> : vector<8xf32>
      %33 = vector.multi_reduction <add>, %32, %cst_22 [1] : vector<8x128xf32> to vector<8xf32>
      %34 = vector.shape_cast %33 : vector<8xf32> to vector<8x1xf32>
      %c1_i32_23 = arith.constant 1 : i32
      %35 = vector.broadcast %c1_i32_23 : i32 to vector<8x128xi32>
      %36 = arith.cmpi eq, %28, %35 : vector<8x128xi32>
      %cst_24 = arith.constant 0.000000e+00 : f32
      %37 = vector.broadcast %cst_24 : f32 to vector<8x128xf32>
      %38 = arith.select %36, %27, %37 : vector<8x128xi1>, vector<8x128xf32>
      %cst_25 = arith.constant dense<0.000000e+00> : vector<8xf32>
      %39 = vector.multi_reduction <add>, %38, %cst_25 [1] : vector<8x128xf32> to vector<8xf32>
      %40 = vector.shape_cast %39 : vector<8xf32> to vector<8x1xf32>
      %41 = math.exp %40 : vector<8x1xf32>
      %cst_26 = arith.constant 9.99999974E-5 : f32
      %42 = vector.broadcast %cst_26 : f32 to vector<8x1xf32>
      %43 = arith.addf %41, %42 : vector<8x1xf32>
      %44 = math.sqrt %43 : vector<8x1xf32>
      %c0_27 = arith.constant 0 : index
      %c0_28 = arith.constant 0 : index
      %45 = vector.load %arg12[%c0_27, %c0_28] : memref<8x1xf32, #tpu.memory_space<vmem>>, vector<8x1xf32>
      %46 = arith.mulf %44, %45 : vector<8x1xf32>
      %47 = arith.addf %34, %46 : vector<8x1xf32>
      %48 = math.exp %47 : vector<8x1xf32>
      %cst_29 = arith.constant 1.000000e+00 : f32
      %49 = vector.broadcast %cst_29 : f32 to vector<8x1xf32>
      %50 = arith.mulf %49, %48 : vector<8x1xf32>
      %c0_30 = arith.constant 0 : index
      %c0_31 = arith.constant 0 : index
      %51 = vector.load %arg17[%c0_30, %c0_31] : memref<8x1xf32, #tpu.memory_space<vmem>>, vector<8x1xf32>
      tpu.vector_store %arg17[%c0_30, %c0_31], %50 {strides = array<i32>} : memref<8x1xf32, #tpu.memory_space<vmem>>, vector<8x1xf32>,
      %c0_i32_32 = arith.constant 0 : i32
      %52 = vector.broadcast %c0_i32_32 : i32 to vector<8x128xi32>
      %53 = arith.cmpi eq, %28, %52 : vector<8x128xi32>
      %cst_33 = arith.constant 0.000000e+00 : f32
      %54 = vector.shape_cast %34 : vector<8x1xf32> to vector<8x1xf32>
      %55 = vector.broadcast %54 : vector<8x1xf32> to vector<8x128xf32>
      %56 = vector.broadcast %cst_33 : f32 to vector<8x128xf32>
      %57 = arith.select %53, %55, %56 : vector<8x128xi1>, vector<8x128xf32>
      %c1_i32_34 = arith.constant 1 : i32
      %58 = vector.broadcast %c1_i32_34 : i32 to vector<8x128xi32>
      %59 = arith.cmpi eq, %28, %58 : vector<8x128xi32>
      %cst_35 = arith.constant 0.000000e+00 : f32
      %60 = vector.shape_cast %43 : vector<8x1xf32> to vector<8x1xf32>
      %61 = vector.broadcast %60 : vector<8x1xf32> to vector<8x128xf32>
      %62 = vector.broadcast %cst_35 : f32 to vector<8x128xf32>
      %63 = arith.select %59, %61, %62 : vector<8x128xi1>, vector<8x128xf32>
      %64 = arith.addf %57, %63 : vector<8x128xf32>
      %c2_i32 = arith.constant 2 : i32
      %65 = vector.broadcast %c2_i32 : i32 to vector<8x128xi32>
      %66 = arith.cmpi eq, %28, %65 : vector<8x128xi32>
      %cst_36 = arith.constant 0.000000e+00 : f32
      %67 = vector.shape_cast %47 : vector<8x1xf32> to vector<8x1xf32>
      %68 = vector.broadcast %67 : vector<8x1xf32> to vector<8x128xf32>
      %69 = vector.broadcast %cst_36 : f32 to vector<8x128xf32>
      %70 = arith.select %66, %68, %69 : vector<8x128xi1>, vector<8x128xf32>
      %71 = arith.addf %64, %70 : vector<8x128xf32>
      %c0_37 = arith.constant 0 : index
      %c0_38 = arith.constant 0 : index
      %72 = vector.load %arg15[%c0_37, %c0_38] : memref<8x128xf32, #tpu.memory_space<vmem>>, vector<8x128xf32>
      tpu.vector_store %arg15[%c0_37, %c0_38], %71 {strides = array<i32>} : memref<8x128xf32, #tpu.memory_space<vmem>>, vector<8x128xf32>,
      %cst_39 = arith.constant -1.000000e+30 : f32
      %73 = vector.broadcast %cst_39 : f32 to vector<8x1xf32>
      %c0_40 = arith.constant 0 : index
      %c0_41 = arith.constant 0 : index
      %74 = vector.load %arg18[%c0_40, %c0_41] : memref<8x1xf32, #tpu.memory_space<vmem>>, vector<8x1xf32>
      tpu.vector_store %arg18[%c0_40, %c0_41], %73 {strides = array<i32>} : memref<8x1xf32, #tpu.memory_space<vmem>>, vector<8x1xf32>,
      %cst_42 = arith.constant 0.000000e+00 : f32
      %75 = vector.broadcast %cst_42 : f32 to vector<8x1xf32>
      %c0_43 = arith.constant 0 : index
      %c0_44 = arith.constant 0 : index
      %76 = vector.load %arg19[%c0_43, %c0_44] : memref<8x1xf32, #tpu.memory_space<vmem>>, vector<8x1xf32>
      tpu.vector_store %arg19[%c0_43, %c0_44], %75 {strides = array<i32>} : memref<8x1xf32, #tpu.memory_space<vmem>>, vector<8x1xf32>,
    } else {
    }
    %c0 = arith.constant 0 : index
    %c0_2 = arith.constant 0 : index
    %5 = vector.load %arg16[%c0, %c0_2] : memref<8x128xbf16, #tpu.memory_space<vmem>>, vector<8x128xbf16>
    %c0_i32_3 = arith.constant 0 : i32
    %6 = arith.cmpi eq, %arg1, %c0_i32_3 : i32
    %7 = arith.extui %6 : i1 to i32
    %c0_i32_4 = arith.constant 0 : i32
    %8 = arith.cmpi ne, %7, %c0_i32_4 : i32
    scf.if %8 {
      %c0_6 = arith.constant 0 : index
      %c0_7 = arith.constant 0 : index
      %12 = vector.load %arg6[%c0_6, %c0_7] : memref<128x128xbf16, #tpu.memory_space<vmem>>, vector<128x128xbf16>
      %cst = arith.constant dense<0.000000e+00> : vector<8x128xf32>
      %13 = tpu.matmul %5, %12, %cst {dimension_numbers = #tpu.dot_dimension_numbers<[1], [0], [0], [1], [0, 0, 1, 1], [], []>} : vector<8x128xbf16>, vector<128x128xbf16>, vector<8x128xf32> -> vector<8x128xf32>
      %c0_8 = arith.constant 0 : index
      %c0_9 = arith.constant 0 : index
      %14 = vector.load %arg7[%c0_8, %c0_9] : memref<1x128xf32, #tpu.memory_space<vmem>>, vector<1x128xf32>
      %15 = vector.broadcast %14 : vector<1x128xf32> to vector<8x128xf32>
      %16 = arith.addf %13, %15 : vector<8x128xf32>
      %c0_10 = arith.constant 0 : index
      %c0_11 = arith.constant 0 : index
      %17 = vector.load %arg18[%c0_10, %c0_11] : memref<8x1xf32, #tpu.memory_space<vmem>>, vector<8x1xf32>
      %cst_12 = arith.constant dense<0xFF800000> : vector<8xf32>
      %18 = vector.multi_reduction <maximumf>, %16, %cst_12 [1] : vector<8x128xf32> to vector<8xf32>
      %19 = vector.shape_cast %18 : vector<8xf32> to vector<8x1xf32>
      %20 = arith.maximumf %17, %19 : vector<8x1xf32>
      %c0_13 = arith.constant 0 : index
      %c0_14 = arith.constant 0 : index
      %21 = vector.load %arg19[%c0_13, %c0_14] : memref<8x1xf32, #tpu.memory_space<vmem>>, vector<8x1xf32>
      %22 = arith.subf %17, %20 : vector<8x1xf32>
      %23 = math.exp %22 : vector<8x1xf32>
      %24 = arith.mulf %21, %23 : vector<8x1xf32>
      %25 = vector.broadcast %20 : vector<8x1xf32> to vector<8x128xf32>
      %26 = arith.subf %16, %25 : vector<8x128xf32>
      %27 = math.exp %26 : vector<8x128xf32>
      %cst_15 = arith.constant dense<0.000000e+00> : vector<8xf32>
      %28 = vector.multi_reduction <add>, %27, %cst_15 [1] : vector<8x128xf32> to vector<8xf32>
      %29 = vector.shape_cast %28 : vector<8xf32> to vector<8x1xf32>
      %30 = arith.addf %24, %29 : vector<8x1xf32>
      %c0_16 = arith.constant 0 : index
      %c0_17 = arith.constant 0 : index
      %31 = vector.load %arg19[%c0_16, %c0_17] : memref<8x1xf32, #tpu.memory_space<vmem>>, vector<8x1xf32>
      tpu.vector_store %arg19[%c0_16, %c0_17], %30 {strides = array<i32>} : memref<8x1xf32, #tpu.memory_space<vmem>>, vector<8x1xf32>,
      %c0_18 = arith.constant 0 : index
      %c0_19 = arith.constant 0 : index
      %32 = vector.load %arg18[%c0_18, %c0_19] : memref<8x1xf32, #tpu.memory_space<vmem>>, vector<8x1xf32>
      tpu.vector_store %arg18[%c0_18, %c0_19], %20 {strides = array<i32>} : memref<8x1xf32, #tpu.memory_space<vmem>>, vector<8x1xf32>,
      %c0_20 = arith.constant 0 : index
      %c0_21 = arith.constant 0 : index
      %c0_22 = arith.constant 0 : index
      %33 = vector.load %arg8[%c0_20, %c0_21, %c0_22] : memref<2x128x128xbf16, #tpu.memory_space<vmem>>, vector<1x128x128xbf16>
      %34 = vector.shape_cast %33 : vector<1x128x128xbf16> to vector<128x128xbf16>
      %cst_23 = arith.constant dense<0.000000e+00> : vector<8x128xf32>
      %35 = tpu.matmul %5, %34, %cst_23 {dimension_numbers = #tpu.dot_dimension_numbers<[1], [0], [0], [1], [0, 0, 1, 1], [], []>} : vector<8x128xbf16>, vector<128x128xbf16>, vector<8x128xf32> -> vector<8x128xf32>
      %c0_24 = arith.constant 0 : index
      %c0_25 = arith.constant 0 : index
      %c0_26 = arith.constant 0 : index
      %36 = vector.load %arg9[%c0_24, %c0_25, %c0_26] : memref<2x1x128xf32, #tpu.memory_space<vmem>>, vector<1x1x128xf32>
      %37 = vector.shape_cast %36 : vector<1x1x128xf32> to vector<1x128xf32>
      %38 = vector.broadcast %37 : vector<1x128xf32> to vector<8x128xf32>
      %39 = arith.addf %35, %38 : vector<8x128xf32>
      %c1 = arith.constant 1 : index
      %c0_27 = arith.constant 0 : index
      %c0_28 = arith.constant 0 : index
      %40 = vector.load %arg8[%c1, %c0_27, %c0_28] : memref<2x128x128xbf16, #tpu.memory_space<vmem>>, vector<1x128x128xbf16>
      %41 = vector.shape_cast %40 : vector<1x128x128xbf16> to vector<128x128xbf16>
      %cst_29 = arith.constant dense<0.000000e+00> : vector<8x128xf32>
      %42 = tpu.matmul %5, %41, %cst_29 {dimension_numbers = #tpu.dot_dimension_numbers<[1], [0], [0], [1], [0, 0, 1, 1], [], []>} : vector<8x128xbf16>, vector<128x128xbf16>, vector<8x128xf32> -> vector<8x128xf32>
      %c1_30 = arith.constant 1 : index
      %c0_31 = arith.constant 0 : index
      %c0_32 = arith.constant 0 : index
      %43 = vector.load %arg9[%c1_30, %c0_31, %c0_32] : memref<2x1x128xf32, #tpu.memory_space<vmem>>, vector<1x1x128xf32>
      %44 = vector.shape_cast %43 : vector<1x1x128xf32> to vector<1x128xf32>
      %45 = vector.broadcast %44 : vector<1x128xf32> to vector<8x128xf32>
      %46 = arith.addf %42, %45 : vector<8x128xf32>
      %cst_33 = arith.constant 1.200000e+01 : f32
      %47 = vector.broadcast %cst_33 : f32 to vector<8x128xf32>
      %48 = arith.minimumf %39, %47 : vector<8x128xf32>
      %49 = math.exp %48 : vector<8x128xf32>
      %c0_34 = arith.constant 0 : index
      %c0_35 = arith.constant 0 : index
      %c0_36 = arith.constant 0 : index
      %50 = vector.load %arg14[%c0_34, %c0_35, %c0_36] : memref<2x8x128xf32, #tpu.memory_space<vmem>>, vector<1x8x128xf32>
      %51 = vector.shape_cast %50 : vector<1x8x128xf32> to vector<8x128xf32>
      %52 = vector.shape_cast %49 : vector<8x128xf32> to vector<1x8x128xf32>
      tpu.vector_store %arg14[%c0_34, %c0_35, %c0_36], %52 {strides = array<i32>} : memref<2x8x128xf32, #tpu.memory_space<vmem>>, vector<1x8x128xf32>,
      %c1_37 = arith.constant 1 : index
      %c0_38 = arith.constant 0 : index
      %c0_39 = arith.constant 0 : index
      %53 = vector.load %arg14[%c1_37, %c0_38, %c0_39] : memref<2x8x128xf32, #tpu.memory_space<vmem>>, vector<1x8x128xf32>
      %54 = vector.shape_cast %53 : vector<1x8x128xf32> to vector<8x128xf32>
      %55 = vector.shape_cast %46 : vector<8x128xf32> to vector<1x8x128xf32>
      tpu.vector_store %arg14[%c1_37, %c0_38, %c0_39], %55 {strides = array<i32>} : memref<2x8x128xf32, #tpu.memory_space<vmem>>, vector<1x8x128xf32>,
    } else {
    }
    %c1_i32 = arith.constant 1 : i32
    %9 = arith.cmpi eq, %arg1, %c1_i32 : i32
    %10 = arith.extui %9 : i1 to i32
    %c0_i32_5 = arith.constant 0 : i32
    %11 = arith.cmpi ne, %10, %c0_i32_5 : i32
    scf.if %11 {
      %c0_6 = arith.constant 0 : index
      %c0_7 = arith.constant 0 : index
      %12 = vector.load %arg6[%c0_6, %c0_7] : memref<128x128xbf16, #tpu.memory_space<vmem>>, vector<128x128xbf16>
      %cst = arith.constant dense<0.000000e+00> : vector<8x128xf32>
      %13 = tpu.matmul %5, %12, %cst {dimension_numbers = #tpu.dot_dimension_numbers<[1], [0], [0], [1], [0, 0, 1, 1], [], []>} : vector<8x128xbf16>, vector<128x128xbf16>, vector<8x128xf32> -> vector<8x128xf32>
      %c0_8 = arith.constant 0 : index
      %c0_9 = arith.constant 0 : index
      %14 = vector.load %arg7[%c0_8, %c0_9] : memref<1x128xf32, #tpu.memory_space<vmem>>, vector<1x128xf32>
      %15 = vector.broadcast %14 : vector<1x128xf32> to vector<8x128xf32>
      %16 = arith.addf %13, %15 : vector<8x128xf32>
      %c0_10 = arith.constant 0 : index
      %c0_11 = arith.constant 0 : index
      %17 = vector.load %arg19[%c0_10, %c0_11] : memref<8x1xf32, #tpu.memory_space<vmem>>, vector<8x1xf32>
      %18 = tpu.reciprocal %17 {approx = true} : vector<8x1xf32> -> vector<8x1xf32>
      %c0_12 = arith.constant 0 : index
      %c0_13 = arith.constant 0 : index
      %19 = vector.load %arg18[%c0_12, %c0_13] : memref<8x1xf32, #tpu.memory_space<vmem>>, vector<8x1xf32>
      %20 = vector.broadcast %19 : vector<8x1xf32> to vector<8x128xf32>
      %21 = arith.subf %16, %20 : vector<8x128xf32>
      %22 = math.exp %21 : vector<8x128xf32>
      %23 = vector.broadcast %18 : vector<8x1xf32> to vector<8x128xf32>
      %24 = arith.mulf %22, %23 : vector<8x128xf32>
      %c0_14 = arith.constant 0 : index
      %c0_15 = arith.constant 0 : index
      %c0_16 = arith.constant 0 : index
      %25 = vector.load %arg13[%c0_14, %c0_15, %c0_16] : memref<2x8x128xf32, #tpu.memory_space<vmem>>, vector<1x8x128xf32>
      %26 = vector.shape_cast %25 : vector<1x8x128xf32> to vector<8x128xf32>
      %27 = vector.shape_cast %24 : vector<8x128xf32> to vector<1x8x128xf32>
      tpu.vector_store %arg13[%c0_14, %c0_15, %c0_16], %27 {strides = array<i32>} : memref<2x8x128xf32, #tpu.memory_space<vmem>>, vector<1x8x128xf32>,
      %c0_17 = arith.constant 0 : index
      %c0_18 = arith.constant 0 : index
      %28 = vector.load %arg17[%c0_17, %c0_18] : memref<8x1xf32, #tpu.memory_space<vmem>>, vector<8x1xf32>
      %29 = vector.broadcast %28 : vector<8x1xf32> to vector<8x128xf32>
      %30 = arith.mulf %29, %24 : vector<8x128xf32>
      %c1 = arith.constant 1 : index
      %c0_19 = arith.constant 0 : index
      %c0_20 = arith.constant 0 : index
      %31 = vector.load %arg13[%c1, %c0_19, %c0_20] : memref<2x8x128xf32, #tpu.memory_space<vmem>>, vector<1x8x128xf32>
      %32 = vector.shape_cast %31 : vector<1x8x128xf32> to vector<8x128xf32>
      %33 = vector.shape_cast %30 : vector<8x128xf32> to vector<1x8x128xf32>
      tpu.vector_store %arg13[%c1, %c0_19, %c0_20], %33 {strides = array<i32>} : memref<2x8x128xf32, #tpu.memory_space<vmem>>, vector<1x8x128xf32>,
    } else {
    }
    return
  }
  func.func @transform_0(%arg0: i32, %arg1: i32, %arg2: i32) -> (i32, i32) {
    %c0_i32 = arith.constant 0 : i32
    %c0_i32_0 = arith.constant 0 : i32
    return %arg0, %c0_i32 : i32, i32
  }
  func.func @transform_1(%arg0: i32, %arg1: i32, %arg2: i32) -> (i32, i32) {
    %c0_i32 = arith.constant 0 : i32
    %c0_i32_0 = arith.constant 0 : i32
    %c0_i32_1 = arith.constant 0 : i32
    return %c0_i32, %c0_i32_0 : i32, i32
  }
  func.func @transform_2(%arg0: i32, %arg1: i32, %arg2: i32) -> (i32, i32) {
    %c0_i32 = arith.constant 0 : i32
    %c0_i32_0 = arith.constant 0 : i32
    %c0_i32_1 = arith.constant 0 : i32
    return %c0_i32, %c0_i32_0 : i32, i32
  }
  func.func @transform_3(%arg0: i32, %arg1: i32, %arg2: i32) -> (i32, i32) {
    %c0_i32 = arith.constant 0 : i32
    %c0_i32_0 = arith.constant 0 : i32
    return %c0_i32, %arg2 : i32, i32
  }
  func.func @transform_4(%arg0: i32, %arg1: i32, %arg2: i32) -> (i32, i32) {
    %c0_i32 = arith.constant 0 : i32
    %c0_i32_0 = arith.constant 0 : i32
    return %c0_i32, %arg2 : i32, i32
  }
  func.func @transform_5(%arg0: i32, %arg1: i32, %arg2: i32) -> (i32, i32, i32) {
    %c1_i32 = arith.constant 1 : i32
    %0 = arith.subi %c1_i32, %arg1 : i32
    %1 = arith.muli %arg2, %0 : i32
    %c1_i32_0 = arith.constant 1 : i32
    %2 = arith.muli %c1_i32_0, %arg1 : i32
    %3 = arith.addi %1, %2 : i32
    %c0_i32 = arith.constant 0 : i32
    %c0_i32_1 = arith.constant 0 : i32
    %c0_i32_2 = arith.constant 0 : i32
    return %c0_i32, %c0_i32_1, %3 : i32, i32, i32
  }
  func.func @transform_6(%arg0: i32, %arg1: i32, %arg2: i32) -> (i32, i32, i32) {
    %c1_i32 = arith.constant 1 : i32
    %0 = arith.subi %c1_i32, %arg1 : i32
    %1 = arith.muli %arg2, %0 : i32
    %c1_i32_0 = arith.constant 1 : i32
    %2 = arith.muli %c1_i32_0, %arg1 : i32
    %3 = arith.addi %1, %2 : i32
    %c0_i32 = arith.constant 0 : i32
    %c0_i32_1 = arith.constant 0 : i32
    %c0_i32_2 = arith.constant 0 : i32
    return %c0_i32, %c0_i32_1, %3 : i32, i32, i32
  }
  func.func @transform_7(%arg0: i32, %arg1: i32, %arg2: i32) -> (i32, i32) {
    %c0_i32 = arith.constant 0 : i32
    %c0_i32_0 = arith.constant 0 : i32
    %c0_i32_1 = arith.constant 0 : i32
    return %c0_i32, %c0_i32_0 : i32, i32
  }
  func.func @transform_8(%arg0: i32, %arg1: i32, %arg2: i32) -> (i32, i32) {
    %c0_i32 = arith.constant 0 : i32
    %c0_i32_0 = arith.constant 0 : i32
    %c0_i32_1 = arith.constant 0 : i32
    return %c0_i32, %c0_i32_0 : i32, i32
  }
  func.func @transform_9(%arg0: i32, %arg1: i32, %arg2: i32) -> (i32, i32) {
    %c0_i32 = arith.constant 0 : i32
    %c0_i32_0 = arith.constant 0 : i32
    return %arg0, %c0_i32 : i32, i32
  }
  func.func @transform_10(%arg0: i32, %arg1: i32, %arg2: i32) -> (i32, i32, i32) {
    %0 = arith.muli %arg2, %arg1 : i32
    %c0_i32 = arith.constant 0 : i32
    %c0_i32_0 = arith.constant 0 : i32
    return %c0_i32, %arg0, %0 : i32, i32, i32
  }
  func.func @transform_11(%arg0: i32, %arg1: i32, %arg2: i32) -> (i32, i32, i32) {
    %c1_i32 = arith.constant 1 : i32
    %0 = arith.subi %c1_i32, %arg1 : i32
    %1 = arith.muli %arg2, %0 : i32
    %c1_i32_0 = arith.constant 1 : i32
    %2 = arith.muli %c1_i32_0, %arg1 : i32
    %3 = arith.addi %1, %2 : i32
    %c0_i32 = arith.constant 0 : i32
    %c0_i32_1 = arith.constant 0 : i32
    return %c0_i32, %arg0, %3 : i32, i32, i32
  }
  func.func @transform_12(%arg0: i32, %arg1: i32, %arg2: i32) -> (i32, i32) {
    %c0_i32 = arith.constant 0 : i32
    %c0_i32_0 = arith.constant 0 : i32
    return %arg0, %c0_i32 : i32, i32
  }
}

</mosaic_0001>

<llo_original>
// kernel: tpu_custom_call.1
$region0: #{tpu_custom_call.1}
  #allocation0 [shape = 'u32[]', space=smem, size = 0x4, offset = 0x4, fixed_abs, tag = 'smem constant byte address 0x4 - core index']
  #allocation1 [shape = 'u32[144,128]{1,0:T(1,128)}', space=vmem, size = 0x12000, scoped, tag = 'internal scratch']
  #allocation2 [shape = 'bf16[8,128]{1,0:T(8,128)(2,1)}', space=vmem, size = 0x800, scoped, tag = 'scratch operand']
  #allocation3 [shape = 'f32[8,1]{1,0:T(8,128)}', space=vmem, size = 0x1000, scoped, tag = 'scratch operand']
  #allocation4 [shape = 'f32[8,1]{1,0:T(8,128)}', space=vmem, size = 0x1000, scoped, tag = 'scratch operand']
  #allocation5 [shape = 'f32[8,1]{1,0:T(8,128)}', space=vmem, size = 0x1000, scoped, tag = 'scratch operand']
  %s0 = inlined_call_operand.vmem [shape: f32[16,32], index: 0, kind: input, shape index: {}]
  %s1 = inlined_call_operand.hbm [shape: bf16[32,128], index: 1, kind: input, shape index: {}]
  %s2 = inlined_call_operand.vmem [shape: f32[1,128], index: 2, kind: input, shape index: {}]
  %s3 = inlined_call_operand.hbm [shape: bf16[128,256], index: 3, kind: input, shape index: {}]
  %s4 = inlined_call_operand.vmem [shape: f32[1,256], index: 4, kind: input, shape index: {}]
  %s5 = inlined_call_operand.hbm [shape: bf16[2,128,256], index: 5, kind: input, shape index: {}]
  %s6 = inlined_call_operand.vmem [shape: f32[2,1,256], index: 6, kind: input, shape index: {}]
  %s7 = inlined_call_operand.hbm [shape: bf16[128,128], index: 7, kind: input, shape index: {}]
  %s8 = inlined_call_operand.vmem [shape: f32[1,128], index: 8, kind: input, shape index: {}]
  %s9 = inlined_call_operand.vmem [shape: f32[16,1], index: 9, kind: input, shape index: {}]
  %s10 = inlined_call_operand.hbm [shape: f32[2,16,256], index: 10, kind: output, shape index: {0}]
  %s11 = inlined_call_operand.hbm [shape: f32[2,16,256], index: 11, kind: output, shape index: {1}]
  %s12 = inlined_call_operand.hbm [shape: f32[16,128], index: 12, kind: output, shape index: {2}]
  %13 = xla_tuple %s10, %s11, %s12
  %s14 = sld [smem:[#allocation0]]
  $region151: #{tpu_custom_call.1} parent=0
    _
  %s16 = ssub.s32 1, %s14
  %s17 = scalar_select 0, %s16, %s14
  $region1: #{tpu_custom_call.1} parent=0
    #allocation6 [shape = 'u8[8192]{0}', space=vmem, size = 0x2000, scoped, tag = 'input window, operand 1, single buffered']
    #allocation7 [shape = 's32[2]{0}', space=sflag, size = 0x8, scoped, tag = 'scoped memory for tpu_custom_call.1']
    #allocation8 [shape = 's32[2]{0}', space=sflag, size = 0x8, scoped, tag = 'scoped memory for tpu_custom_call.1']
    #allocation9 [shape = 'u8[65536]{0}', space=vmem, size = 0x10000, scoped, tag = 'input window, operand 3']
    #allocation10 [shape = 's32[2]{0}', space=sflag, size = 0x8, scoped, tag = 'scoped memory for tpu_custom_call.1']
    #allocation11 [shape = 'u8[131072]{0}', space=vmem, size = 0x20000, scoped, tag = 'input window, operand 5']
    #allocation12 [shape = 'u8[2048]{0}', space=vmem, size = 0x800, scoped, tag = 'input window, operand 6']
    #allocation13 [shape = 'u8[32768]{0}', space=vmem, size = 0x8000, scoped, tag = 'input window, operand 7, single buffered']
    #allocation14 [shape = 's32[1]{0}', space=sflag, size = 0x4, scoped, tag = 'scoped memory for tpu_custom_call.1']
    #allocation15 [shape = 'u8[16384]{0}', space=vmem, size = 0x4000, scoped, tag = 'output window, operand 0']
    #allocation16 [shape = 'u8[16384]{0}', space=vmem, size = 0x4000, scoped, tag = 'output window, operand 1']
    #allocation17 [shape = 's32[2]{0}', space=sflag, size = 0x8, scoped, tag = 'scoped memory for tpu_custom_call.1']
    #allocation18 [shape = 'u8[8192]{0}', space=vmem, size = 0x2000, scoped, tag = 'output window, operand 2']
    %18 = vsyncpa [#allocation7], 0
    %19 = vsyncpa [#allocation10], 0
    %s20 = scalar_lea.sflag [#allocation10], 1
    %21 = vsyncpa %s20, 0
    %22 = vsyncpa [#allocation14], 0
    %23 = vsyncpa [#allocation8], 0
    %s24 = scalar_lea.sflag [#allocation8], 1
    %25 = vsyncpa %s24, 0
    %26 = vsyncpa [#allocation17], 0
    %s27 = scalar_lea.sflag [#allocation17], 1
    %28 = vsyncpa %s27, 0
    loop: start=0, step=1, limit=10
    $region2: #{tpu_custom_call.1} parent=1 // loop_pre_header
      _
    $region3: #{tpu_custom_call.1} parent=1 // loop_header
      %s30 = sphi 0, %s34
      %p31 = scmp.ge.s32.totalorder %s30, 10
      %s37 = sphi 0, %s56
      %s38 = sphi 0, %s52
      %s39 = sphi 0, %s48
      %s40 = sphi 0, %s37
      %s41 = sphi 0, %s38
      %s42 = sphi 0, %s39
      %s43 = sphi 0, %s40
      %s44 = sphi 0, %s41
      %s45 = sphi 0, %s42
      %s59 = sphi 0, %s61
      %s62 = sphi 0, %s59
      %s63 = sphi 0, %s62
      %s79 = sphi 0, %s63
      %s83 = sphi 0, %s83
      %s85 = sphi 0, %s83
      %s86 = sphi 0, %s85
      %s100 = sphi 0, %s86
      %s104 = sphi 0, %s104
      %s106 = sphi 0, %s104
      %s107 = sphi 0, %s106
      %s121 = sphi 0, %s107
      %s127 = sphi 0, %s129
      %s130 = sphi 0, %s127
      %s131 = sphi 0, %s130
      %s147 = sphi 0, %s131
      %s153 = sphi 0, %s155
      %s156 = sphi 0, %s153
      %s157 = sphi 0, %s156
      %s173 = sphi 0, %s157
      %s185 = sphi 0, %s187
      %s188 = sphi 0, %s185
      %s189 = sphi 0, %s188
      %s205 = sphi 0, %s189
      %s217 = sphi 0, %s219
      %s220 = sphi 0, %s217
      %s221 = sphi 0, %s220
      %s237 = sphi 0, %s221
      %s241 = sphi 0, %s241
      %s243 = sphi 0, %s241
      %s244 = sphi 0, %s243
      %s258 = sphi 0, %s244
      %s262 = sphi 0, %s262
      %s264 = sphi 0, %s262
      %s265 = sphi 0, %s264
      %s279 = sphi 0, %s265
      %s285 = sphi 0, %s287
      %s288 = sphi 0, %s285
      %s289 = sphi 0, %s288
      %s305 = sphi 0, %s289
      %s315 = sphi 0, %s317
      %s318 = sphi 0, %s315
      %s319 = sphi 0, %s318
      %s335 = sphi 0, %s319
      %s349 = sphi 0, %s351
      %s352 = sphi 0, %s349
      %s353 = sphi 0, %s352
      %s369 = sphi 0, %s353
      %s375 = sphi 0, %s377
      %s378 = sphi 0, %s375
      %s379 = sphi 0, %s378
      %s395 = sphi 0, %s379
    $region4: #{tpu_custom_call.1} parent=1 // loop_header_branch
      %33 = sbr.rel (%p31) target = $region8
    $region5: #{tpu_custom_call.1} parent=1 // loop_body
      %s35 = ssub.s32 %s30, 1
      %s36 = ssub.s32 %s30, 2
      %s46 = sadd.s32 1, %s39
      %p47 = scmp.ge.s32.totalorder %s46, 2
      %s48 = scalar_select %p47, 0, %s46
      %s49 = sadd.s32 1, %s38
      %s50 = scalar_select %p47, %s49, %s38
      %p51 = scmp.ge.s32.totalorder %s50, 2
      %s52 = scalar_select %p51, 0, %s50
      %s53 = sadd.s32 1, %s37
      %s54 = scalar_select %p51, %s53, %s37
      %p55 = scmp.ge.s32.totalorder %s54, 2
      %s56 = scalar_select %p55, 0, %s54
      %s57 = ssub.s32 %s37, %s56
      %p58 = scmp.eq.s32.totalorder %s57, 0
      %s60 = sadd.s32 %s59, 1
      %s61 = scalar_select %p58, %s59, %s60
      %p64 = pneg %p58
      %p65 = scmp.eq.s32.totalorder %s30, 7
      %p66 = por %p64, %p65
      %p67 = scmp.ne.s32.totalorder %s59, %s62
      %p68 = scmp.eq.s32.totalorder %s30, 0
      %p69 = por %p67, %p68
      %p70 = scmp.ne.s32.totalorder %s59, %s62
      %p71 = scmp.eq.s32.totalorder %s35, 7
      %p72 = por %p70, %p71
      %p73 = scmp.ne.s32.totalorder %s62, %s63
      %p74 = scmp.eq.s32.totalorder %s35, 0
      %p75 = por %p73, %p74
      %p76 = scmp.ne.s32.totalorder %s62, %s63
      %p77 = scmp.eq.s32.totalorder %s36, 7
      %p78 = por %p76, %p77
      %p80 = scmp.ne.s32.totalorder %s63, %s79
      %p81 = scmp.eq.s32.totalorder %s36, 0
      %p82 = por %p80, %p81
      %s84 = sadd.s32 %s83, 1
      %p87 = scmp.eq.s32.totalorder %s30, 7
      %p88 = scmp.ne.s32.totalorder %s83, %s85
      %p89 = scmp.eq.s32.totalorder %s30, 0
      %p90 = por %p88, %p89
      %p91 = scmp.ne.s32.totalorder %s83, %s85
      %p92 = scmp.eq.s32.totalorder %s35, 7
      %p93 = por %p91, %p92
      %p94 = scmp.ne.s32.totalorder %s85, %s86
      %p95 = scmp.eq.s32.totalorder %s35, 0
      %p96 = por %p94, %p95
      %p97 = scmp.ne.s32.totalorder %s85, %s86
      %p98 = scmp.eq.s32.totalorder %s36, 7
      %p99 = por %p97, %p98
      %p101 = scmp.ne.s32.totalorder %s86, %s100
      %p102 = scmp.eq.s32.totalorder %s36, 0
      %p103 = por %p101, %p102
      %s105 = sadd.s32 %s104, 1
      %p108 = scmp.eq.s32.totalorder %s30, 7
      %p109 = scmp.ne.s32.totalorder %s104, %s106
      %p110 = scmp.eq.s32.totalorder %s30, 0
      %p111 = por %p109, %p110
      %p112 = scmp.ne.s32.totalorder %s104, %s106
      %p113 = scmp.eq.s32.totalorder %s35, 7
      %p114 = por %p112, %p113
      %p115 = scmp.ne.s32.totalorder %s106, %s107
      %p116 = scmp.eq.s32.totalorder %s35, 0
      %p117 = por %p115, %p116
      %p118 = scmp.ne.s32.totalorder %s106, %s107
      %p119 = scmp.eq.s32.totalorder %s36, 7
      %p120 = por %p118, %p119
      %p122 = scmp.ne.s32.totalorder %s107, %s121
      %p123 = scmp.eq.s32.totalorder %s36, 0
      %p124 = por %p122, %p123
      %s125 = ssub.s32 %s39, %s48
      %p126 = scmp.eq.s32.totalorder %s125, 0
      %s128 = sadd.s32 %s127, 1
      %s129 = scalar_select %p126, %s127, %s128
      %p132 = pneg %p126
      %p133 = scmp.eq.s32.totalorder %s30, 7
      %p134 = por %p132, %p133
      %p135 = scmp.ne.s32.totalorder %s127, %s130
      %p136 = scmp.eq.s32.totalorder %s30, 0
      %p137 = por %p135, %p136
      %p138 = scmp.ne.s32.totalorder %s127, %s130
      %p139 = scmp.eq.s32.totalorder %s35, 7
      %p140 = por %p138, %p139
      %p141 = scmp.ne.s32.totalorder %s130, %s131
      %p142 = scmp.eq.s32.totalorder %s35, 0
      %p143 = por %p141, %p142
      %p144 = scmp.ne.s32.totalorder %s130, %s131
      %p145 = scmp.eq.s32.totalorder %s36, 7
      %p146 = por %p144, %p145
      %p148 = scmp.ne.s32.totalorder %s131, %s147
      %p149 = scmp.eq.s32.totalorder %s36, 0
      %p150 = por %p148, %p149
      %s151 = ssub.s32 %s39, %s48
      %p152 = scmp.eq.s32.totalorder %s151, 0
      %s154 = sadd.s32 %s153, 1
      %s155 = scalar_select %p152, %s153, %s154
      %p158 = pneg %p152
      %p159 = scmp.eq.s32.totalorder %s30, 7
      %p160 = por %p158, %p159
      %p161 = scmp.ne.s32.totalorder %s153, %s156
      %p162 = scmp.eq.s32.totalorder %s30, 0
      %p163 = por %p161, %p162
      %p164 = scmp.ne.s32.totalorder %s153, %s156
      %p165 = scmp.eq.s32.totalorder %s35, 7
      %p166 = por %p164, %p165
      %p167 = scmp.ne.s32.totalorder %s156, %s157
      %p168 = scmp.eq.s32.totalorder %s35, 0
      %p169 = por %p167, %p168
      %p170 = scmp.ne.s32.totalorder %s156, %s157
      %p171 = scmp.eq.s32.totalorder %s36, 7
      %p172 = por %p170, %p171
      %p174 = scmp.ne.s32.totalorder %s157, %s173
      %p175 = scmp.eq.s32.totalorder %s36, 0
      %p176 = por %p174, %p175
      %s177 = ssub.s32 1, %s38
      %s178 = smul.u32 %s39, %s177
      %s179 = sadd.s32 %s178, %s38
      %s180 = ssub.s32 1, %s52
      %s181 = smul.u32 %s48, %s180
      %s182 = sadd.s32 %s181, %s52
      %s183 = ssub.s32 %s179, %s182
      %p184 = scmp.eq.s32.totalorder %s183, 0
      %s186 = sadd.s32 %s185, 1
      %s187 = scalar_select %p184, %s185, %s186
      %p190 = pneg %p184
      %p191 = scmp.eq.s32.totalorder %s30, 7
      %p192 = por %p190, %p191
      %p193 = scmp.ne.s32.totalorder %s185, %s188
      %p194 = scmp.eq.s32.totalorder %s30, 0
      %p195 = por %p193, %p194
      %p196 = scmp.ne.s32.totalorder %s185, %s188
      %p197 = scmp.eq.s32.totalorder %s35, 7
      %p198 = por %p196, %p197
      %p199 = scmp.ne.s32.totalorder %s188, %s189
      %p200 = scmp.eq.s32.totalorder %s35, 0
      %p201 = por %p199, %p200
      %p202 = scmp.ne.s32.totalorder %s188, %s189
      %p203 = scmp.eq.s32.totalorder %s36, 7
      %p204 = por %p202, %p203
      %p206 = scmp.ne.s32.totalorder %s189, %s205
      %p207 = scmp.eq.s32.totalorder %s36, 0
      %p208 = por %p206, %p207
      %s209 = ssub.s32 1, %s38
      %s210 = smul.u32 %s39, %s209
      %s211 = sadd.s32 %s210, %s38
      %s212 = ssub.s32 1, %s52
      %s213 = smul.u32 %s48, %s212
      %s214 = sadd.s32 %s213, %s52
      %s215 = ssub.s32 %s211, %s214
      %p216 = scmp.eq.s32.totalorder %s215, 0
      %s218 = sadd.s32 %s217, 1
      %s219 = scalar_select %p216, %s217, %s218
      %p222 = pneg %p216
      %p223 = scmp.eq.s32.totalorder %s30, 7
      %p224 = por %p222, %p223
      %p225 = scmp.ne.s32.totalorder %s217, %s220
      %p226 = scmp.eq.s32.totalorder %s30, 0
      %p227 = por %p225, %p226
      %p228 = scmp.ne.s32.totalorder %s217, %s220
      %p229 = scmp.eq.s32.totalorder %s35, 7
      %p230 = por %p228, %p229
      %p231 = scmp.ne.s32.totalorder %s220, %s221
      %p232 = scmp.eq.s32.totalorder %s35, 0
      %p233 = por %p231, %p232
      %p234 = scmp.ne.s32.totalorder %s220, %s221
      %p235 = scmp.eq.s32.totalorder %s36, 7
      %p236 = por %p234, %p235
      %p238 = scmp.ne.s32.totalorder %s221, %s237
      %p239 = scmp.eq.s32.totalorder %s36, 0
      %p240 = por %p238, %p239
      %s242 = sadd.s32 %s241, 1
      %p245 = scmp.eq.s32.totalorder %s30, 7
      %p246 = scmp.ne.s32.totalorder %s241, %s243
      %p247 = scmp.eq.s32.totalorder %s30, 0
      %p248 = por %p246, %p247
      %p249 = scmp.ne.s32.totalorder %s241, %s243
      %p250 = scmp.eq.s32.totalorder %s35, 7
      %p251 = por %p249, %p250
      %p252 = scmp.ne.s32.totalorder %s243, %s244
      %p253 = scmp.eq.s32.totalorder %s35, 0
      %p254 = por %p252, %p253
      %p255 = scmp.ne.s32.totalorder %s243, %s244
      %p256 = scmp.eq.s32.totalorder %s36, 7
      %p257 = por %p255, %p256
      %p259 = scmp.ne.s32.totalorder %s244, %s258
      %p260 = scmp.eq.s32.totalorder %s36, 0
      %p261 = por %p259, %p260
      %s263 = sadd.s32 %s262, 1
      %p266 = scmp.eq.s32.totalorder %s30, 7
      %p267 = scmp.ne.s32.totalorder %s262, %s264
      %p268 = scmp.eq.s32.totalorder %s30, 0
      %p269 = por %p267, %p268
      %p270 = scmp.ne.s32.totalorder %s262, %s264
      %p271 = scmp.eq.s32.totalorder %s35, 7
      %p272 = por %p270, %p271
      %p273 = scmp.ne.s32.totalorder %s264, %s265
      %p274 = scmp.eq.s32.totalorder %s35, 0
      %p275 = por %p273, %p274
      %p276 = scmp.ne.s32.totalorder %s264, %s265
      %p277 = scmp.eq.s32.totalorder %s36, 7
      %p278 = por %p276, %p277
      %p280 = scmp.ne.s32.totalorder %s265, %s279
      %p281 = scmp.eq.s32.totalorder %s36, 0
      %p282 = por %p280, %p281
      %s283 = ssub.s32 %s37, %s56
      %p284 = scmp.eq.s32.totalorder %s283, 0
      %s286 = sadd.s32 %s285, 1
      %s287 = scalar_select %p284, %s285, %s286
      %p290 = pneg %p284
      %p291 = scmp.eq.s32.totalorder %s30, 7
      %p292 = por %p290, %p291
      %p293 = scmp.ne.s32.totalorder %s285, %s288
      %p294 = scmp.eq.s32.totalorder %s30, 0
      %p295 = por %p293, %p294
      %p296 = scmp.ne.s32.totalorder %s285, %s288
      %p297 = scmp.eq.s32.totalorder %s35, 7
      %p298 = por %p296, %p297
      %p299 = scmp.ne.s32.totalorder %s288, %s289
      %p300 = scmp.eq.s32.totalorder %s35, 0
      %p301 = por %p299, %p300
      %p302 = scmp.ne.s32.totalorder %s288, %s289
      %p303 = scmp.eq.s32.totalorder %s36, 7
      %p304 = por %p302, %p303
      %p306 = scmp.ne.s32.totalorder %s289, %s305
      %p307 = scmp.eq.s32.totalorder %s36, 0
      %p308 = por %p306, %p307
      %s309 = smul.u32 %s39, %s38
      %s310 = smul.u32 %s48, %s52
      %s311 = ssub.s32 %s37, %s56
      %s312 = ssub.s32 %s309, %s310
      %s313 = sor.u32 %s311, %s312
      %p314 = scmp.eq.s32.totalorder %s313, 0
      %s316 = sadd.s32 %s315, 1
      %s317 = scalar_select %p314, %s315, %s316
      %p320 = pneg %p314
      %p321 = scmp.eq.s32.totalorder %s30, 7
      %p322 = por %p320, %p321
      %p323 = scmp.ne.s32.totalorder %s315, %s318
      %p324 = scmp.eq.s32.totalorder %s30, 0
      %p325 = por %p323, %p324
      %p326 = scmp.ne.s32.totalorder %s315, %s318
      %p327 = scmp.eq.s32.totalorder %s35, 7
      %p328 = por %p326, %p327
      %p329 = scmp.ne.s32.totalorder %s318, %s319
      %p330 = scmp.eq.s32.totalorder %s35, 0
      %p331 = por %p329, %p330
      %p332 = scmp.ne.s32.totalorder %s318, %s319
      %p333 = scmp.eq.s32.totalorder %s36, 7
      %p334 = por %p332, %p333
      %p336 = scmp.ne.s32.totalorder %s319, %s335
      %p337 = scmp.eq.s32.totalorder %s36, 0
      %p338 = por %p336, %p337
      %s339 = ssub.s32 1, %s38
      %s340 = smul.u32 %s39, %s339
      %s341 = sadd.s32 %s340, %s38
      %s342 = ssub.s32 1, %s52
      %s343 = smul.u32 %s48, %s342
      %s344 = sadd.s32 %s343, %s52
      %s345 = ssub.s32 %s37, %s56
      %s346 = ssub.s32 %s341, %s344
      %s347 = sor.u32 %s345, %s346
      %p348 = scmp.eq.s32.totalorder %s347, 0
      %s350 = sadd.s32 %s349, 1
      %s351 = scalar_select %p348, %s349, %s350
      %p354 = pneg %p348
      %p355 = scmp.eq.s32.totalorder %s30, 7
      %p356 = por %p354, %p355
      %p357 = scmp.ne.s32.totalorder %s349, %s352
      %p358 = scmp.eq.s32.totalorder %s30, 0
      %p359 = por %p357, %p358
      %p360 = scmp.ne.s32.totalorder %s349, %s352
      %p361 = scmp.eq.s32.totalorder %s35, 7
      %p362 = por %p360, %p361
      %p363 = scmp.ne.s32.totalorder %s352, %s353
      %p364 = scmp.eq.s32.totalorder %s35, 0
      %p365 = por %p363, %p364
      %p366 = scmp.ne.s32.totalorder %s352, %s353
      %p367 = scmp.eq.s32.totalorder %s36, 7
      %p368 = por %p366, %p367
      %p370 = scmp.ne.s32.totalorder %s353, %s369
      %p371 = scmp.eq.s32.totalorder %s36, 0
      %p372 = por %p370, %p371
      %s373 = ssub.s32 %s37, %s56
      %p374 = scmp.eq.s32.totalorder %s373, 0
      %s376 = sadd.s32 %s375, 1
      %s377 = scalar_select %p374, %s375, %s376
      %p380 = pneg %p374
      %p381 = scmp.eq.s32.totalorder %s30, 7
      %p382 = por %p380, %p381
      %p383 = scmp.ne.s32.totalorder %s375, %s378
      %p384 = scmp.eq.s32.totalorder %s30, 0
      %p385 = por %p383, %p384
      %p386 = scmp.ne.s32.totalorder %s375, %s378
      %p387 = scmp.eq.s32.totalorder %s35, 7
      %p388 = por %p386, %p387
      %p389 = scmp.ne.s32.totalorder %s378, %s379
      %p390 = scmp.eq.s32.totalorder %s35, 0
      %p391 = por %p389, %p390
      %p392 = scmp.ne.s32.totalorder %s378, %s379
      %p393 = scmp.eq.s32.totalorder %s36, 7
      %p394 = por %p392, %p393
      %p396 = scmp.ne.s32.totalorder %s379, %s395
      %p397 = scmp.eq.s32.totalorder %s36, 0
      %p398 = por %p396, %p397
      %p399 = scmp.le.s32.totalorder 1, %s30
      %p400 = scmp.lt.s32.totalorder %s30, 9
      %p401 = pnand %p399, %p400
      %p402 = pneg %p401
      // Predicated region
      $region9: #{tpu_custom_call.1} parent=5 // pred_check
        _
      $region10: #{tpu_custom_call.1} parent=5 // pred_check_branch
        %404 = sbr.rel (%p401) target = $region12
      $region11: #{tpu_custom_call.1} parent=5 // pred_region
        %s405 = ssub.s32 %s30, 1
        // Predicated region
        $region13: #{tpu_custom_call.1} parent=11 // pred_check
          %p406 = pneg %p96
        $region14: #{tpu_custom_call.1} parent=11 // pred_check_branch
          %408 = sbr.rel (%p406) target = $region16
        $region15: #{tpu_custom_call.1} parent=11 // pred_region
          %s410 = ssub.s32 256, 256
          %411 = vsyncadd [#allocation7], %s410
          %s412 = sshll.u32 [#allocation6], 4
          %s413 = int_to_ptr.vmem [resolvable:$true] %s412
          %418 = dma.hbm_to_vmem [thread:$0]  %s1, 256, %s413, [#allocation7], 64, 64, 4
        $region16: #{tpu_custom_call.1} parent=11 // pred_fallthru
          _
        // Predicated region
        $region17: #{tpu_custom_call.1} parent=11 // pred_check
          %p419 = pneg %p117
        $region18: #{tpu_custom_call.1} parent=11 // pred_check_branch
          %421 = sbr.rel (%p419) target = $region20
        $region19: #{tpu_custom_call.1} parent=11 // pred_region
          _
        $region20: #{tpu_custom_call.1} parent=11 // pred_fallthru
          _
        // Predicated region
        $region21: #{tpu_custom_call.1} parent=11 // pred_check
          %p422 = pneg %p254
        $region22: #{tpu_custom_call.1} parent=11 // pred_check_branch
          %424 = sbr.rel (%p422) target = $region24
        $region23: #{tpu_custom_call.1} parent=11 // pred_region
          %s426 = ssub.s32 1024, 1024
          %427 = vsyncadd [#allocation14], %s426
          %s428 = sshll.u32 [#allocation13], 4
          %s429 = int_to_ptr.vmem [resolvable:$true] %s428
          %434 = dma.hbm_to_vmem [thread:$0]  %s7, 1024, %s429, [#allocation14], 64, 64, 4
        $region24: #{tpu_custom_call.1} parent=11 // pred_fallthru
          _
        // Predicated region
        $region25: #{tpu_custom_call.1} parent=11 // pred_check
          %p435 = pneg %p275
        $region26: #{tpu_custom_call.1} parent=11 // pred_check_branch
          %437 = sbr.rel (%p435) target = $region28
        $region27: #{tpu_custom_call.1} parent=11 // pred_region
          _
        $region28: #{tpu_custom_call.1} parent=11 // pred_fallthru
          _
      $region12: #{tpu_custom_call.1} parent=5 // pred_fallthru
        _
      %p438 = scmp.lt.s32.totalorder %s30, 8
      // Predicated region
      $region29: #{tpu_custom_call.1} parent=5 // pred_check
        %p439 = pneg %p438
      $region30: #{tpu_custom_call.1} parent=5 // pred_check_branch
        %441 = sbr.rel (%p439) target = $region32
      $region31: #{tpu_custom_call.1} parent=5 // pred_region
        // Predicated region
        $region33: #{tpu_custom_call.1} parent=31 // pred_check
          %p442 = pneg %p69
        $region34: #{tpu_custom_call.1} parent=31 // pred_check_branch
          %444 = sbr.rel (%p442) target = $region36
        $region35: #{tpu_custom_call.1} parent=31 // pred_region
          %p445 = scmp.lt.s32.totalorder %s37, 1
          %s446 = scalar_select %p445, %s37, 1
          %s447 = smul.addr %s446, 8
          %s448 = scalar_lea.vmem %s0, %s447
        $region36: #{tpu_custom_call.1} parent=31 // pred_fallthru
          _
        // Predicated region
        $region37: #{tpu_custom_call.1} parent=31 // pred_check
          %p449 = pneg %p137
        $region38: #{tpu_custom_call.1} parent=31 // pred_check_branch
          %451 = sbr.rel (%p449) target = $region40
        $region39: #{tpu_custom_call.1} parent=31 // pred_region
          %s452 = sand.u32 %s30, 1
          %s453 = scalar_lea.sflag [#allocation10], %s452
          %s454 = sand.u32 %s127, 1
          %s455 = smul.addr %s454, 64
          %s456 = scalar_lea.vmem [#allocation9], %s455
          %s458 = ssub.s32 1024, 1024
          %459 = vsyncadd %s453, %s458
          %s460 = smul.addr %s39, 64
          %s461 = scalar_lea.hbm %s3, %s460
          %s462 = sshll.u32 %s456, 4
          %s463 = int_to_ptr.vmem [resolvable:$true] %s462
          %468 = dma.hbm_to_vmem [thread:$0]  %s461, 1024, %s463, %s453, 128, 64, 4
        $region40: #{tpu_custom_call.1} parent=31 // pred_fallthru
          _
        // Predicated region
        $region41: #{tpu_custom_call.1} parent=31 // pred_check
          %p469 = pneg %p163
        $region42: #{tpu_custom_call.1} parent=31 // pred_check_branch
          %471 = sbr.rel (%p469) target = $region44
        $region43: #{tpu_custom_call.1} parent=31 // pred_region
          %p472 = scmp.lt.s32.totalorder %s39, 1
          %s473 = scalar_select %p472, %s39, 1
          %s474 = scalar_lea.vmem %s4, %s473
        $region44: #{tpu_custom_call.1} parent=31 // pred_fallthru
          _
        // Predicated region
        $region45: #{tpu_custom_call.1} parent=31 // pred_check
          %p475 = pneg %p195
        $region46: #{tpu_custom_call.1} parent=31 // pred_check_branch
          %477 = sbr.rel (%p475) target = $region48
        $region47: #{tpu_custom_call.1} parent=31 // pred_region
          %s478 = sand.u32 %s30, 1
          %s479 = scalar_lea.sflag [#allocation10], %s478
          %s480 = sand.u32 %s185, 1
          %s481 = smul.addr %s480, 128
          %s482 = scalar_lea.vmem [#allocation11], %s481
          %s483 = ssub.s32 1, %s38
          %s484 = smul.u32 %s39, %s483
          %s485 = sadd.s32 %s484, %s38
          %s487 = ssub.s32 2048, 2048
          %488 = vsyncadd %s479, %s487
          %s489 = smul.addr %s485, 64
          %s490 = scalar_lea.hbm %s5, %s489
          %s491 = sshll.u32 %s482, 4
          %s492 = int_to_ptr.vmem [resolvable:$true] %s491
          %497 = dma.hbm_to_vmem [thread:$0]  %s490, 2048, %s492, %s479, 128, 64, 4
        $region48: #{tpu_custom_call.1} parent=31 // pred_fallthru
          _
        // Predicated region
        $region49: #{tpu_custom_call.1} parent=31 // pred_check
          %p498 = pneg %p227
        $region50: #{tpu_custom_call.1} parent=31 // pred_check_branch
          %500 = sbr.rel (%p498) target = $region52
        $region51: #{tpu_custom_call.1} parent=31 // pred_region
          %s501 = sand.u32 %s217, 1
          %s502 = sand.u32 %s217, 1
          %s503 = smul.addr %s502, 2
          %s504 = scalar_lea.vmem [#allocation12], %s503
          %s505 = ssub.s32 1, %s38
          %s506 = smul.u32 %s39, %s505
          %s507 = sadd.s32 %s506, %s38
          %s508 = scalar_lea.vmem %s6, %s507
          // Predicated region
          $region53: #{tpu_custom_call.1} parent=51 // pred_check
            _
          $region54: #{tpu_custom_call.1} parent=51 // pred_check_branch
            %510 = sbr.rel (0) target = $region56
          $region55: #{tpu_custom_call.1} parent=51 // pred_region
            // Predicated region
            $region57: #{tpu_custom_call.1} parent=55 // pred_check
              _
            $region58: #{tpu_custom_call.1} parent=55 // pred_check_branch
              %512 = sbr.rel target = $region60
            $region59: #{tpu_custom_call.1} parent=55 // pred_region
              // Predicated region
              $region72: #{tpu_custom_call.1} parent=59 // pred_check
                _
              $region73: #{tpu_custom_call.1} parent=59 // pred_check_branch
                %529 = sbr.rel (0) target = $region75
              $region74: #{tpu_custom_call.1} parent=59 // pred_region
                loop: start=0, step=1, limit=1
                $region76: #{tpu_custom_call.1} parent=74 // loop_pre_header
                  _
                $region77: #{tpu_custom_call.1} parent=74 // loop_header
                  %s532 = sphi 0, %s536
                  %p533 = scmp.ge.s32.totalorder %s532, 1
                  %s537 = sphi %s508, %s508
                  %s538 = sphi %s504, %s504
                $region78: #{tpu_custom_call.1} parent=74 // loop_header_branch
                  %535 = sbr.rel (%p533) target = $region82
                $region79: #{tpu_custom_call.1} parent=74 // loop_body
                  %v539 = vld [vmem:[%s537] sm:$0x1]
                  %540 = vst [vmem:[%s538] sm:$0x1] %v539
                  %v541 = vld [vmem:[%s537 + $0x2] sm:$0x1]
                  %542 = vst [vmem:[%s538 + $0x1] sm:$0x1] %v541
                $region80: #{tpu_custom_call.1} parent=74 // loop_footer
                  %s536 = sadd.s32 1, %s532
                $region81: #{tpu_custom_call.1} parent=74 // loop_footer_branch
                  %531 = sbr.rel target = $region77
                $region82: #{tpu_custom_call.1} parent=74 // loop_exit
                  _
              $region75: #{tpu_custom_call.1} parent=59 // pred_fallthru
                _
            $region60: #{tpu_custom_call.1} parent=55 // pred_fallthru
              _
            // Predicated region
            $region61: #{tpu_custom_call.1} parent=55 // pred_check
              _
            $region62: #{tpu_custom_call.1} parent=55 // pred_check_branch
              %514 = sbr.rel (0) target = $region64
            $region63: #{tpu_custom_call.1} parent=55 // pred_region
              loop: start=0, step=1, limit=1
              $region65: #{tpu_custom_call.1} parent=63 // loop_pre_header
                _
              $region66: #{tpu_custom_call.1} parent=63 // loop_header
                %s517 = sphi 0, %s521
                %p518 = scmp.ge.s32.totalorder %s517, 1
                %s522 = sphi %s508, %s508
                %s523 = sphi %s504, %s504
              $region67: #{tpu_custom_call.1} parent=63 // loop_header_branch
                %520 = sbr.rel (%p518) target = $region71
              $region68: #{tpu_custom_call.1} parent=63 // loop_body
                %v524 = vld [vmem:[%s522] sm:$0x1]
                %525 = vst [vmem:[%s523] sm:$0x1] %v524
                %v526 = vld [vmem:[%s522 + $0x2] sm:$0x1]
                %527 = vst [vmem:[%s523 + $0x1] sm:$0x1] %v526
              $region69: #{tpu_custom_call.1} parent=63 // loop_footer
                %s521 = sadd.s32 1, %s517
              $region70: #{tpu_custom_call.1} parent=63 // loop_footer_branch
                %516 = sbr.rel target = $region66
              $region71: #{tpu_custom_call.1} parent=63 // loop_exit
                _
            $region64: #{tpu_custom_call.1} parent=55 // pred_fallthru
              _
          $region56: #{tpu_custom_call.1} parent=51 // pred_fallthru
            _
          %543 = vnop
        $region52: #{tpu_custom_call.1} parent=31 // pred_fallthru
          _
        // Predicated region
        $region83: #{tpu_custom_call.1} parent=31 // pred_check
          %p544 = pneg %p295
        $region84: #{tpu_custom_call.1} parent=31 // pred_check_branch
          %546 = sbr.rel (%p544) target = $region86
        $region85: #{tpu_custom_call.1} parent=31 // pred_region
          %p547 = scmp.lt.s32.totalorder %s37, 1
          %s548 = scalar_select %p547, %s37, 1
          %s549 = smul.addr %s548, 8
          %s550 = scalar_lea.vmem %s9, %s549
        $region86: #{tpu_custom_call.1} parent=31 // pred_fallthru
          _
      $region32: #{tpu_custom_call.1} parent=5 // pred_fallthru
        _
      %p551 = scmp.le.s32.totalorder 1, %s30
      %p552 = scmp.lt.s32.totalorder %s30, 9
      %p553 = pnand %p551, %p552
      %p554 = pneg %p553
      // Predicated region
      $region87: #{tpu_custom_call.1} parent=5 // pred_check
        _
      $region88: #{tpu_custom_call.1} parent=5 // pred_check_branch
        %556 = sbr.rel (%p553) target = $region90
      $region89: #{tpu_custom_call.1} parent=5 // pred_region
        %s557 = ssub.s32 %s30, 1
        // Predicated region
        $region91: #{tpu_custom_call.1} parent=89 // pred_check
          %p558 = pneg %p96
        $region92: #{tpu_custom_call.1} parent=89 // pred_check_branch
          %560 = sbr.rel (%p558) target = $region94
        $region93: #{tpu_custom_call.1} parent=89 // pred_region
          %561 = dma.done [#allocation7], 256
        $region94: #{tpu_custom_call.1} parent=89 // pred_fallthru
          _
        %s562 = sand.u32 %s35, 1
        %s563 = scalar_lea.sflag [#allocation10], %s562
        %s564 = sand.u32 %s130, 1
        %s565 = smul.addr %s564, 64
        %s566 = scalar_lea.vmem [#allocation9], %s565
        // Predicated region
        $region95: #{tpu_custom_call.1} parent=89 // pred_check
          %p567 = pneg %p143
        $region96: #{tpu_custom_call.1} parent=89 // pred_check_branch
          %569 = sbr.rel (%p567) target = $region98
        $region97: #{tpu_custom_call.1} parent=89 // pred_region
          %570 = dma.done %s563, 1024
        $region98: #{tpu_custom_call.1} parent=89 // pred_fallthru
          _
        %s571 = sand.u32 %s35, 1
        %s572 = scalar_lea.sflag [#allocation10], %s571
        %s573 = sand.u32 %s188, 1
        %s574 = smul.addr %s573, 128
        %s575 = scalar_lea.vmem [#allocation11], %s574
        // Predicated region
        $region99: #{tpu_custom_call.1} parent=89 // pred_check
          %p576 = pneg %p201
        $region100: #{tpu_custom_call.1} parent=89 // pred_check_branch
          %578 = sbr.rel (%p576) target = $region102
        $region101: #{tpu_custom_call.1} parent=89 // pred_region
          %579 = dma.done %s572, 2048
        $region102: #{tpu_custom_call.1} parent=89 // pred_fallthru
          _
        %s580 = sand.u32 %s220, 1
        %s581 = sand.u32 %s220, 1
        %s582 = smul.addr %s581, 2
        %s583 = scalar_lea.vmem [#allocation12], %s582
        // Predicated region
        $region103: #{tpu_custom_call.1} parent=89 // pred_check
          %p584 = pneg %p233
        $region104: #{tpu_custom_call.1} parent=89 // pred_check_branch
          %586 = sbr.rel (%p584) target = $region106
        $region105: #{tpu_custom_call.1} parent=89 // pred_region
          _
        $region106: #{tpu_custom_call.1} parent=89 // pred_fallthru
          _
        // Predicated region
        $region107: #{tpu_custom_call.1} parent=89 // pred_check
          %p587 = pneg %p254
        $region108: #{tpu_custom_call.1} parent=89 // pred_check_branch
          %589 = sbr.rel (%p587) target = $region110
        $region109: #{tpu_custom_call.1} parent=89 // pred_region
          %590 = dma.done [#allocation14], 1024
        $region110: #{tpu_custom_call.1} parent=89 // pred_fallthru
          _
        %p591 = scmp.lt.s32.totalorder %s40, 1
        %s592 = scalar_select %p591, %s40, 1
        %s593 = smul.addr %s592, 8
        %s594 = scalar_lea.vmem %s0, %s593
        %p595 = pneg %p75
        %p596 = pneg %p72
        %p597 = pneg %p96
        %p598 = pneg %p93
        %p599 = pneg %p117
        %p600 = pneg %p114
        %s601 = sand.u32 %s35, 1
        %s602 = scalar_lea.sflag [#allocation10], %s601
        %s603 = sand.u32 %s130, 1
        %s604 = smul.addr %s603, 64
        %s605 = scalar_lea.vmem [#allocation9], %s604
        %p606 = pneg %p143
        %p607 = pneg %p140
        %p608 = scmp.lt.s32.totalorder %s42, 1
        %s609 = scalar_select %p608, %s42, 1
        %s610 = scalar_lea.vmem %s4, %s609
        %p611 = pneg %p169
        %p612 = pneg %p166
        %s613 = sand.u32 %s35, 1
        %s614 = scalar_lea.sflag [#allocation10], %s613
        %s615 = sand.u32 %s188, 1
        %s616 = smul.addr %s615, 128
        %s617 = scalar_lea.vmem [#allocation11], %s616
        %p618 = pneg %p201
        %p619 = pneg %p198
        %s620 = sand.u32 %s220, 1
        %s621 = sand.u32 %s220, 1
        %s622 = smul.addr %s621, 2
        %s623 = scalar_lea.vmem [#allocation12], %s622
        %p624 = pneg %p233
        %p625 = pneg %p230
        %p626 = pneg %p254
        %p627 = pneg %p251
        %p628 = pneg %p275
        %p629 = pneg %p272
        %p630 = scmp.lt.s32.totalorder %s40, 1
        %s631 = scalar_select %p630, %s40, 1
        %s632 = smul.addr %s631, 8
        %s633 = scalar_lea.vmem %s9, %s632
        %p634 = pneg %p301
        %p635 = pneg %p298
        %p636 = pneg %p331
        %p637 = pneg %p328
        %s638 = sand.u32 %s318, 1
        %s639 = scalar_lea.sflag [#allocation8], %s638
        %s640 = sand.u32 %s318, 1
        %s641 = smul.addr %s640, 16
        %s642 = scalar_lea.vmem [#allocation15], %s641
        %p643 = pneg %p365
        %p644 = pneg %p362
        %s645 = sand.u32 %s35, 1
        %s646 = scalar_lea.sflag [#allocation17], %s645
        %s647 = sand.u32 %s352, 1
        %s648 = smul.addr %s647, 16
        %s649 = scalar_lea.vmem [#allocation16], %s648
        %p650 = pneg %p391
        %p651 = pneg %p388
        %s652 = sand.u32 %s35, 1
        %s653 = scalar_lea.sflag [#allocation17], %s652
        %s654 = sand.u32 %s378, 1
        %s655 = smul.addr %s654, 8
        %s656 = scalar_lea.vmem [#allocation18], %s655
        %p657 = scmp.lt.s32.totalorder %s40, 1
        %s658 = scalar_select %p657, %s40, 1
        %s659 = smul.addr %s658, 8
        %s660 = scalar_lea.vmem %s0, %s659
        %p661 = scmp.lt.s32.totalorder %s42, 1
        %s662 = scalar_select %p661, %s42, 1
        %s663 = scalar_lea.vmem %s4, %s662
        %s664 = ssub.s32 1, %s41
        %s665 = smul.u32 %s42, %s664
        %s666 = sadd.s32 %s665, %s41
        %s667 = ssub.s32 1, %s41
        %s668 = smul.u32 %s42, %s667
        %s669 = sadd.s32 %s668, %s41
        %p670 = scmp.lt.s32.totalorder %s40, 1
        %s671 = scalar_select %p670, %s40, 1
        %s672 = smul.addr %s671, 8
        %s673 = scalar_lea.vmem %s9, %s672
        %s674 = smul.u32 %s42, %s41
        %s675 = ssub.s32 1, %s41
        %s676 = smul.u32 %s42, %s675
        %s677 = sadd.s32 %s676, %s41
        %p679 = scmp.eq.s32.totalorder %s41, 0
        %p680 = scmp.eq.s32.totalorder %s42, 0
        %p681 = pnand %p679, %p680
        %p682 = pneg %p681
        // Predicated region
        $region111: #{tpu_custom_call.1} parent=89 // pred_check
          _
        $region112: #{tpu_custom_call.1} parent=89 // pred_check_branch
          %684 = sbr.rel (%p681) target = $region114
        $region113: #{tpu_custom_call.1} parent=89 // pred_region
          %v685 = vld [vmem:[%s660] sm:$0xff]
          %v686 = vpack.c.bf16 %v685, %v685
          %v687 = vld [vmem:[#allocation6] sm:$0xf]
          %v688 = vld [vmem:[#allocation6 + $0x4] sm:$0xf]
          %v689 = vld [vmem:[#allocation6 + $0x8] sm:$0xf]
          %v690 = vld [vmem:[#allocation6 + $0xc] sm:$0xf]
          %v691 = vld [vmem:[%s2] sm:$0x1]
          %v693 = vlaneseq
          %v694 = vshrl.u32 %v693, 7
          %v695 = vsub.s32 0, %v694
          %v696 = vrot.slane %v691, %v695
          %v702 = vunpack.c.l.b16 %v687
          %v703 = vunpack.c.l.b16 %v688
          %v704 = vunpack.c.l.b16 %v689
          %v705 = vunpack.c.l.b16 %v690
          %v706 = vpack.c.b16 %v703, %v702
          %v707 = vpack.c.b16 %v705, %v704
          %vm710 = vcmask 261120
          %v712 = vsel %vm710, %v686, 0
          %714 = vmatprep.subr.bf16.mxu0 0
          %715 = vmatpush1.bf16.msra.mxu0 %v706
          %716 = vmatprep.subr.bf16.mxu0 0
          %717 = vmatpush1.bf16.msra.mxu0 %v707
          %718 = vmatprep.subr.bf16.mxu0 0
          %719 = vmatpush1.bf16.msra.mxu0 0
          %720 = vmatprep.subr.bf16.mxu0 0
          %721 = vmatpush1.bf16.msra.mxu0 0
          %722 = vmatprep.subr.bf16.mxu0 0
          %723 = vmatpush1.bf16.msra.mxu0 0
          %724 = vmatprep.subr.bf16.mxu0 0
          %725 = vmatpush1.bf16.msra.mxu0 0
          %726 = vmatprep.subr.bf16.mxu0 0
          %727 = vmatpush1.bf16.msra.mxu0 0
          %728 = vmatprep.subr.bf16.mxu0 0
          %729 = vmatpush1.bf16.msra.mxu0 0
          %730 = vmatprep.subr.bf16.mxu0 0
          %731 = vmatpush1.bf16.msra.mxu0 0
          %732 = vmatprep.subr.bf16.mxu0 0
          %733 = vmatpush1.bf16.msra.mxu0 0
          %734 = vmatprep.subr.bf16.mxu0 0
          %735 = vmatpush1.bf16.msra.mxu0 0
          %736 = vmatprep.subr.bf16.mxu0 0
          %737 = vmatpush1.bf16.msra.mxu0 0
          %738 = vmatprep.subr.bf16.mxu0 0
          %739 = vmatpush1.bf16.msra.mxu0 0
          %740 = vmatprep.subr.bf16.mxu0 0
          %741 = vmatpush1.bf16.msra.mxu0 0
          %742 = vmatprep.subr.bf16.mxu0 0
          %743 = vmatpush1.bf16.msra.mxu0 0
          %744 = vmatprep.subr.bf16.mxu0 0
          %745 = vmatpush1.bf16.msra.mxu0 0
          %746 = vmatprep.mubr.bf16.mxu0 0
          %747 = vmatmul.mubr.bf16.gmra.mrb[0].mxu0 %v712
          %v748 = vpop.f32.mrb[0].mxu0
          %v749 = vadd.f32 %v696, %v748
          %v750 = vpop.f32.mrb[0].mxu0
          %v751 = vpop.f32.mrb[0].mxu0
          %v752 = vpop.f32.mrb[0].mxu0
          %753 = vdwg.mxu0
          %v754 = vmax.f32 %v749, 0.0
          %v755 = vpack.c.bf16 %v754, %v754
          %756 = vst [vmem:[#allocation2] sm:$0xf] %v755
          %v757 = vld [vmem:[#allocation13] sm:$0xf]
          %v758 = vld [vmem:[#allocation13 + $0x4] sm:$0xf]
          %v759 = vld [vmem:[#allocation13 + $0x8] sm:$0xf]
          %v760 = vld [vmem:[#allocation13 + $0xc] sm:$0xf]
          %v761 = vld [vmem:[#allocation13 + $0x10] sm:$0xf]
          %v762 = vld [vmem:[#allocation13 + $0x14] sm:$0xf]
          %v763 = vld [vmem:[#allocation13 + $0x18] sm:$0xf]
          %v764 = vld [vmem:[#allocation13 + $0x1c] sm:$0xf]
          %v765 = vld [vmem:[#allocation13 + $0x20] sm:$0xf]
          %v766 = vld [vmem:[#allocation13 + $0x24] sm:$0xf]
          %v767 = vld [vmem:[#allocation13 + $0x28] sm:$0xf]
          %v768 = vld [vmem:[#allocation13 + $0x2c] sm:$0xf]
          %v769 = vld [vmem:[#allocation13 + $0x30] sm:$0xf]
          %v770 = vld [vmem:[#allocation13 + $0x34] sm:$0xf]
          %v771 = vld [vmem:[#allocation13 + $0x38] sm:$0xf]
          %v772 = vld [vmem:[#allocation13 + $0x3c] sm:$0xf]
          %v773 = vld [vmem:[%s8] sm:$0x1]
          %v775 = vlaneseq
          %v776 = vshrl.u32 %v775, 7
          %v777 = vsub.s32 0, %v776
          %v778 = vrot.slane %v773, %v777
          %v796 = vunpack.c.l.b16 %v757
          %v797 = vunpack.c.l.b16 %v758
          %v798 = vunpack.c.l.b16 %v759
          %v799 = vunpack.c.l.b16 %v760
          %v800 = vunpack.c.l.b16 %v761
          %v801 = vunpack.c.l.b16 %v762
          %v802 = vunpack.c.l.b16 %v763
          %v803 = vunpack.c.l.b16 %v764
          %v804 = vunpack.c.l.b16 %v765
          %v805 = vunpack.c.l.b16 %v766
          %v806 = vunpack.c.l.b16 %v767
          %v807 = vunpack.c.l.b16 %v768
          %v808 = vunpack.c.l.b16 %v769
          %v809 = vunpack.c.l.b16 %v770
          %v810 = vunpack.c.l.b16 %v771
          %v811 = vunpack.c.l.b16 %v772
          %v812 = vpack.c.b16 %v797, %v796
          %v813 = vpack.c.b16 %v799, %v798
          %v814 = vpack.c.b16 %v801, %v800
          %v815 = vpack.c.b16 %v803, %v802
          %v816 = vpack.c.b16 %v805, %v804
          %v817 = vpack.c.b16 %v807, %v806
          %v818 = vpack.c.b16 %v809, %v808
          %v819 = vpack.c.b16 %v811, %v810
          %828 = vmatprep.subr.bf16.mxu0 0
          %829 = vmatpush1.bf16.msra.mxu0 %v812
          %830 = vmatprep.subr.bf16.mxu0 0
          %831 = vmatpush1.bf16.msra.mxu0 %v813
          %832 = vmatprep.subr.bf16.mxu0 0
          %833 = vmatpush1.bf16.msra.mxu0 %v814
          %834 = vmatprep.subr.bf16.mxu0 0
          %835 = vmatpush1.bf16.msra.mxu0 %v815
          %836 = vmatprep.subr.bf16.mxu0 0
          %837 = vmatpush1.bf16.msra.mxu0 %v816
          %838 = vmatprep.subr.bf16.mxu0 0
          %839 = vmatpush1.bf16.msra.mxu0 %v817
          %840 = vmatprep.subr.bf16.mxu0 0
          %841 = vmatpush1.bf16.msra.mxu0 %v818
          %842 = vmatprep.subr.bf16.mxu0 0
          %843 = vmatpush1.bf16.msra.mxu0 %v819
          %844 = vmatprep.subr.bf16.mxu0 0
          %845 = vmatpush1.bf16.msra.mxu0 0
          %846 = vmatprep.subr.bf16.mxu0 0
          %847 = vmatpush1.bf16.msra.mxu0 0
          %848 = vmatprep.subr.bf16.mxu0 0
          %849 = vmatpush1.bf16.msra.mxu0 0
          %850 = vmatprep.subr.bf16.mxu0 0
          %851 = vmatpush1.bf16.msra.mxu0 0
          %852 = vmatprep.subr.bf16.mxu0 0
          %853 = vmatpush1.bf16.msra.mxu0 0
          %854 = vmatprep.subr.bf16.mxu0 0
          %855 = vmatpush1.bf16.msra.mxu0 0
          %856 = vmatprep.subr.bf16.mxu0 0
          %857 = vmatpush1.bf16.msra.mxu0 0
          %858 = vmatprep.subr.bf16.mxu0 0
          %859 = vmatpush1.bf16.msra.mxu0 0
          %860 = vmatprep.mubr.bf16.mxu0 0
          %861 = vmatmul.mubr.bf16.gmra.mrb[0].mxu0 %v755
          %v862 = vpop.f32.mrb[0].mxu0
          %v863 = vadd.f32 %v778, %v862
          %v864 = vpop.f32.mrb[0].mxu0
          %v865 = vpop.f32.mrb[0].mxu0
          %v866 = vpop.f32.mrb[0].mxu0
          %867 = vdwg.mxu0
          %v868 = vlaneseq
          %v869 = vand.u32 %v868, 127
          %vm870 = vcmp.eq.s32.totalorder %v869, 0
          %v871 = vsel %vm870, %v863, 0.0
          %872 = vadd.xlane.f32.xlu0 %v871
          %v873 = vpop.xlane.xlu0 %872
          %vm874 = vcmp.eq.s32.totalorder %v869, 1
          %v875 = vsel %vm874, %v863, 0.0
          %876 = vadd.xlane.f32.xlu0 %v875
          %v877 = vpop.xlane.xlu0 %876
          %v878 = vmul.f32 %v877, 1.442695
          %v879 = vpow.pop %v878
          %v880 = vadd.f32 %v879, 0.0001
          %v881 = vrsqrt.pop %v880
          %v882 = vmul.f32 %v880, %v881
          %vm883 = vcmp.eq.f32.partialorder %v880, inf
          %v884 = vsel %vm883, %v880, %v882
          %vm885 = vcmp.eq.f32.partialorder %v880, 0.0
          %v886 = vand.u32 %v880, 2147483648
          %v887 = vsel %vm885, %v886, %v884
          %v888 = vld [vmem:[%s673] sm:$0xff]
          %v889 = vmul.f32 %v887, %v888
          %v890 = vadd.f32 %v873, %v889
          %v891 = vmul.f32 %v890, 1.442695
          %v892 = vpow.pop %v891
          %vm893 = vcmask 7168
          %894 = vst.msk [vmem:[#allocation3] sm:$0xff] %vm893, %v892
          %v895 = vsel %vm870, %v873, 0.0
          %v896 = vsel %vm874, %v880, 0.0
          %v897 = vadd.f32 %v895, %v896
          %vm898 = vcmp.eq.s32.totalorder %v869, 2
          %900 = vset.pattern.permute.xlu0 0
          %901 = vperm.xlu0 %900, %v890
          %v902 = vpop.permute.xlu0 %901
          %v904 = vsel %vm898, %v902, 0.0
          %v905 = vadd.f32 %v897, %v904
          %906 = vst [vmem:[%s656] sm:$0xff] %v905
          %907 = vst.msk [vmem:[#allocation4] sm:$0xff] %vm893, -1e+30
          %908 = vst.msk [vmem:[#allocation5] sm:$0xff] %vm893, 0.0
        $region114: #{tpu_custom_call.1} parent=89 // pred_fallthru
          _
        %v909 = vld [vmem:[#allocation2] sm:$0xf]
        // Predicated region
        $region115: #{tpu_custom_call.1} parent=89 // pred_check
          %p910 = pneg %p679
        $region116: #{tpu_custom_call.1} parent=89 // pred_check_branch
          %912 = sbr.rel (%p910) target = $region118
        $region117: #{tpu_custom_call.1} parent=89 // pred_region
          %v913 = vld [vmem:[%s566] sm:$0xf]
          %v914 = vld [vmem:[%s566 + $0x4] sm:$0xf]
          %v915 = vld [vmem:[%s566 + $0x8] sm:$0xf]
          %v916 = vld [vmem:[%s566 + $0xc] sm:$0xf]
          %v917 = vld [vmem:[%s566 + $0x10] sm:$0xf]
          %v918 = vld [vmem:[%s566 + $0x14] sm:$0xf]
          %v919 = vld [vmem:[%s566 + $0x18] sm:$0xf]
          %v920 = vld [vmem:[%s566 + $0x1c] sm:$0xf]
          %v921 = vld [vmem:[%s566 + $0x20] sm:$0xf]
          %v922 = vld [vmem:[%s566 + $0x24] sm:$0xf]
          %v923 = vld [vmem:[%s566 + $0x28] sm:$0xf]
          %v924 = vld [vmem:[%s566 + $0x2c] sm:$0xf]
          %v925 = vld [vmem:[%s566 + $0x30] sm:$0xf]
          %v926 = vld [vmem:[%s566 + $0x34] sm:$0xf]
          %v927 = vld [vmem:[%s566 + $0x38] sm:$0xf]
          %v928 = vld [vmem:[%s566 + $0x3c] sm:$0xf]
          %v929 = vld [vmem:[%s663] sm:$0x1]
          %v931 = vlaneseq
          %v932 = vshrl.u32 %v931, 7
          %v933 = vsub.s32 0, %v932
          %v934 = vrot.slane %v929, %v933
          %v952 = vunpack.c.l.b16 %v913
          %v953 = vunpack.c.l.b16 %v914
          %v954 = vunpack.c.l.b16 %v915
          %v955 = vunpack.c.l.b16 %v916
          %v956 = vunpack.c.l.b16 %v917
          %v957 = vunpack.c.l.b16 %v918
          %v958 = vunpack.c.l.b16 %v919
          %v959 = vunpack.c.l.b16 %v920
          %v960 = vunpack.c.l.b16 %v921
          %v961 = vunpack.c.l.b16 %v922
          %v962 = vunpack.c.l.b16 %v923
          %v963 = vunpack.c.l.b16 %v924
          %v964 = vunpack.c.l.b16 %v925
          %v965 = vunpack.c.l.b16 %v926
          %v966 = vunpack.c.l.b16 %v927
          %v967 = vunpack.c.l.b16 %v928
          %v968 = vpack.c.b16 %v953, %v952
          %v969 = vpack.c.b16 %v955, %v954
          %v970 = vpack.c.b16 %v957, %v956
          %v971 = vpack.c.b16 %v959, %v958
          %v972 = vpack.c.b16 %v961, %v960
          %v973 = vpack.c.b16 %v963, %v962
          %v974 = vpack.c.b16 %v965, %v964
          %v975 = vpack.c.b16 %v967, %v966
          %984 = vmatprep.subr.bf16.mxu0 0
          %985 = vmatpush1.bf16.msra.mxu0 %v968
          %986 = vmatprep.subr.bf16.mxu0 0
          %987 = vmatpush1.bf16.msra.mxu0 %v969
          %988 = vmatprep.subr.bf16.mxu0 0
          %989 = vmatpush1.bf16.msra.mxu0 %v970
          %990 = vmatprep.subr.bf16.mxu0 0
          %991 = vmatpush1.bf16.msra.mxu0 %v971
          %992 = vmatprep.subr.bf16.mxu0 0
          %993 = vmatpush1.bf16.msra.mxu0 %v972
          %994 = vmatprep.subr.bf16.mxu0 0
          %995 = vmatpush1.bf16.msra.mxu0 %v973
          %996 = vmatprep.subr.bf16.mxu0 0
          %997 = vmatpush1.bf16.msra.mxu0 %v974
          %998 = vmatprep.subr.bf16.mxu0 0
          %999 = vmatpush1.bf16.msra.mxu0 %v975
          %1000 = vmatprep.subr.bf16.mxu0 0
          %1001 = vmatpush1.bf16.msra.mxu0 0
          %1002 = vmatprep.subr.bf16.mxu0 0
          %1003 = vmatpush1.bf16.msra.mxu0 0
          %1004 = vmatprep.subr.bf16.mxu0 0
          %1005 = vmatpush1.bf16.msra.mxu0 0
          %1006 = vmatprep.subr.bf16.mxu0 0
          %1007 = vmatpush1.bf16.msra.mxu0 0
          %1008 = vmatprep.subr.bf16.mxu0 0
          %1009 = vmatpush1.bf16.msra.mxu0 0
          %1010 = vmatprep.subr.bf16.mxu0 0
          %1011 = vmatpush1.bf16.msra.mxu0 0
          %1012 = vmatprep.subr.bf16.mxu0 0
          %1013 = vmatpush1.bf16.msra.mxu0 0
          %1014 = vmatprep.subr.bf16.mxu0 0
          %1015 = vmatpush1.bf16.msra.mxu0 0
          %1016 = vmatprep.mubr.bf16.mxu0 0
          %1017 = vmatmul.mubr.bf16.gmra.mrb[0].mxu0 %v909
          %v1018 = vpop.f32.mrb[0].mxu0
          %v1019 = vadd.f32 %v934, %v1018
          %v1020 = vpop.f32.mrb[0].mxu0
          %v1021 = vpop.f32.mrb[0].mxu0
          %v1022 = vpop.f32.mrb[0].mxu0
          %1023 = vdwg.mxu0
          %v1024 = vld [vmem:[#allocation4] sm:$0xff]
          %1025 = vmax.xlane.f32.xlu0 %v1019
          %v1026 = vpop.xlane.xlu0 %1025
          %v1027 = vmax.f32 %v1024, %v1026
          %v1028 = vld [vmem:[#allocation5] sm:$0xff]
          %v1029 = vsub.f32 %v1024, %v1027
          %v1030 = vmul.f32 %v1029, 1.442695
          %v1031 = vpow.pop %v1030
          %v1032 = vmul.f32 %v1028, %v1031
          %1034 = vset.pattern.permute.xlu0 0
          %1035 = vperm.xlu0 %1034, %v1027
          %v1036 = vpop.permute.xlu0 %1035
          %v1038 = vsub.f32 %v1019, %v1036
          %v1039 = vmul.f32 %v1038, 1.442695
          %v1040 = vpow.pop %v1039
          %1041 = vadd.xlane.f32.xlu0 %v1040
          %v1042 = vpop.xlane.xlu0 %1041
          %v1043 = vadd.f32 %v1032, %v1042
          %vm1044 = vcmask 7168
          %1045 = vst.msk [vmem:[#allocation5] sm:$0xff] %vm1044, %v1043
          %1046 = vst.msk [vmem:[#allocation4] sm:$0xff] %vm1044, %v1027
          %v1047 = vld [vmem:[%s575] sm:$0xf]
          %v1048 = vld [vmem:[%s575 + $0x4] sm:$0xf]
          %v1049 = vld [vmem:[%s575 + $0x8] sm:$0xf]
          %v1050 = vld [vmem:[%s575 + $0xc] sm:$0xf]
          %v1051 = vld [vmem:[%s575 + $0x10] sm:$0xf]
          %v1052 = vld [vmem:[%s575 + $0x14] sm:$0xf]
          %v1053 = vld [vmem:[%s575 + $0x18] sm:$0xf]
          %v1054 = vld [vmem:[%s575 + $0x1c] sm:$0xf]
          %v1055 = vld [vmem:[%s575 + $0x20] sm:$0xf]
          %v1056 = vld [vmem:[%s575 + $0x24] sm:$0xf]
          %v1057 = vld [vmem:[%s575 + $0x28] sm:$0xf]
          %v1058 = vld [vmem:[%s575 + $0x2c] sm:$0xf]
          %v1059 = vld [vmem:[%s575 + $0x30] sm:$0xf]
          %v1060 = vld [vmem:[%s575 + $0x34] sm:$0xf]
          %v1061 = vld [vmem:[%s575 + $0x38] sm:$0xf]
          %v1062 = vld [vmem:[%s575 + $0x3c] sm:$0xf]
          %v1063 = vld [vmem:[%s583] sm:$0x1]
          %v1065 = vlaneseq
          %v1066 = vshrl.u32 %v1065, 7
          %v1067 = vsub.s32 0, %v1066
          %v1068 = vrot.slane %v1063, %v1067
          %v1086 = vunpack.c.l.b16 %v1047
          %v1087 = vunpack.c.l.b16 %v1048
          %v1088 = vunpack.c.l.b16 %v1049
          %v1089 = vunpack.c.l.b16 %v1050
          %v1090 = vunpack.c.l.b16 %v1051
          %v1091 = vunpack.c.l.b16 %v1052
          %v1092 = vunpack.c.l.b16 %v1053
          %v1093 = vunpack.c.l.b16 %v1054
          %v1094 = vunpack.c.l.b16 %v1055
          %v1095 = vunpack.c.l.b16 %v1056
          %v1096 = vunpack.c.l.b16 %v1057
          %v1097 = vunpack.c.l.b16 %v1058
          %v1098 = vunpack.c.l.b16 %v1059
          %v1099 = vunpack.c.l.b16 %v1060
          %v1100 = vunpack.c.l.b16 %v1061
          %v1101 = vunpack.c.l.b16 %v1062
          %v1102 = vpack.c.b16 %v1087, %v1086
          %v1103 = vpack.c.b16 %v1089, %v1088
          %v1104 = vpack.c.b16 %v1091, %v1090
          %v1105 = vpack.c.b16 %v1093, %v1092
          %v1106 = vpack.c.b16 %v1095, %v1094
          %v1107 = vpack.c.b16 %v1097, %v1096
          %v1108 = vpack.c.b16 %v1099, %v1098
          %v1109 = vpack.c.b16 %v1101, %v1100
          %1118 = vmatprep.subr.bf16.mxu0 0
          %1119 = vmatpush1.bf16.msra.mxu0 %v1102
          %1120 = vmatprep.subr.bf16.mxu0 0
          %1121 = vmatpush1.bf16.msra.mxu0 %v1103
          %1122 = vmatprep.subr.bf16.mxu0 0
          %1123 = vmatpush1.bf16.msra.mxu0 %v1104
          %1124 = vmatprep.subr.bf16.mxu0 0
          %1125 = vmatpush1.bf16.msra.mxu0 %v1105
          %1126 = vmatprep.subr.bf16.mxu0 0
          %1127 = vmatpush1.bf16.msra.mxu0 %v1106
          %1128 = vmatprep.subr.bf16.mxu0 0
          %1129 = vmatpush1.bf16.msra.mxu0 %v1107
          %1130 = vmatprep.subr.bf16.mxu0 0
          %1131 = vmatpush1.bf16.msra.mxu0 %v1108
          %1132 = vmatprep.subr.bf16.mxu0 0
          %1133 = vmatpush1.bf16.msra.mxu0 %v1109
          %1134 = vmatprep.subr.bf16.mxu0 0
          %1135 = vmatpush1.bf16.msra.mxu0 0
          %1136 = vmatprep.subr.bf16.mxu0 0
          %1137 = vmatpush1.bf16.msra.mxu0 0
          %1138 = vmatprep.subr.bf16.mxu0 0
          %1139 = vmatpush1.bf16.msra.mxu0 0
          %1140 = vmatprep.subr.bf16.mxu0 0
          %1141 = vmatpush1.bf16.msra.mxu0 0
          %1142 = vmatprep.subr.bf16.mxu0 0
          %1143 = vmatpush1.bf16.msra.mxu0 0
          %1144 = vmatprep.subr.bf16.mxu0 0
          %1145 = vmatpush1.bf16.msra.mxu0 0
          %1146 = vmatprep.subr.bf16.mxu0 0
          %1147 = vmatpush1.bf16.msra.mxu0 0
          %1148 = vmatprep.subr.bf16.mxu0 0
          %1149 = vmatpush1.bf16.msra.mxu0 0
          %1150 = vmatprep.mubr.bf16.mxu0 0
          %1151 = vmatmul.mubr.bf16.gmra.mrb[0].mxu0 %v909
          %v1152 = vpop.f32.mrb[0].mxu0
          %v1153 = vadd.f32 %v1068, %v1152
          %v1154 = vpop.f32.mrb[0].mxu0
          %v1155 = vpop.f32.mrb[0].mxu0
          %v1156 = vpop.f32.mrb[0].mxu0
          %1157 = vdwg.mxu0
          %s1158 = scalar_lea.vmem %s575, 64 [#allocation11]
          %v1159 = vld [vmem:[%s1158] sm:$0xf]
          %v1160 = vld [vmem:[%s1158 + $0x4] sm:$0xf]
          %v1161 = vld [vmem:[%s1158 + $0x8] sm:$0xf]
          %v1162 = vld [vmem:[%s1158 + $0xc] sm:$0xf]
          %v1163 = vld [vmem:[%s1158 + $0x10] sm:$0xf]
          %v1164 = vld [vmem:[%s1158 + $0x14] sm:$0xf]
          %v1165 = vld [vmem:[%s1158 + $0x18] sm:$0xf]
          %v1166 = vld [vmem:[%s1158 + $0x1c] sm:$0xf]
          %v1167 = vld [vmem:[%s1158 + $0x20] sm:$0xf]
          %v1168 = vld [vmem:[%s1158 + $0x24] sm:$0xf]
          %v1169 = vld [vmem:[%s1158 + $0x28] sm:$0xf]
          %v1170 = vld [vmem:[%s1158 + $0x2c] sm:$0xf]
          %v1171 = vld [vmem:[%s1158 + $0x30] sm:$0xf]
          %v1172 = vld [vmem:[%s1158 + $0x34] sm:$0xf]
          %v1173 = vld [vmem:[%s1158 + $0x38] sm:$0xf]
          %v1174 = vld [vmem:[%s1158 + $0x3c] sm:$0xf]
          %s1175 = scalar_lea.vmem %s583, 1 [#allocation12]
          %v1176 = vld [vmem:[%s1175] sm:$0x1]
          %v1178 = vlaneseq
          %v1179 = vshrl.u32 %v1178, 7
          %v1180 = vsub.s32 0, %v1179
          %v1181 = vrot.slane %v1176, %v1180
          %v1199 = vunpack.c.l.b16 %v1159
          %v1200 = vunpack.c.l.b16 %v1160
          %v1201 = vunpack.c.l.b16 %v1161
          %v1202 = vunpack.c.l.b16 %v1162
          %v1203 = vunpack.c.l.b16 %v1163
          %v1204 = vunpack.c.l.b16 %v1164
          %v1205 = vunpack.c.l.b16 %v1165
          %v1206 = vunpack.c.l.b16 %v1166
          %v1207 = vunpack.c.l.b16 %v1167
          %v1208 = vunpack.c.l.b16 %v1168
          %v1209 = vunpack.c.l.b16 %v1169
          %v1210 = vunpack.c.l.b16 %v1170
          %v1211 = vunpack.c.l.b16 %v1171
          %v1212 = vunpack.c.l.b16 %v1172
          %v1213 = vunpack.c.l.b16 %v1173
          %v1214 = vunpack.c.l.b16 %v1174
          %v1215 = vpack.c.b16 %v1200, %v1199
          %v1216 = vpack.c.b16 %v1202, %v1201
          %v1217 = vpack.c.b16 %v1204, %v1203
          %v1218 = vpack.c.b16 %v1206, %v1205
          %v1219 = vpack.c.b16 %v1208, %v1207
          %v1220 = vpack.c.b16 %v1210, %v1209
          %v1221 = vpack.c.b16 %v1212, %v1211
          %v1222 = vpack.c.b16 %v1214, %v1213
          %1231 = vmatprep.subr.bf16.mxu0 0
          %1232 = vmatpush1.bf16.msra.mxu0 %v1215
          %1233 = vmatprep.subr.bf16.mxu0 0
          %1234 = vmatpush1.bf16.msra.mxu0 %v1216
          %1235 = vmatprep.subr.bf16.mxu0 0
          %1236 = vmatpush1.bf16.msra.mxu0 %v1217
          %1237 = vmatprep.subr.bf16.mxu0 0
          %1238 = vmatpush1.bf16.msra.mxu0 %v1218
          %1239 = vmatprep.subr.bf16.mxu0 0
          %1240 = vmatpush1.bf16.msra.mxu0 %v1219
          %1241 = vmatprep.subr.bf16.mxu0 0
          %1242 = vmatpush1.bf16.msra.mxu0 %v1220
          %1243 = vmatprep.subr.bf16.mxu0 0
          %1244 = vmatpush1.bf16.msra.mxu0 %v1221
          %1245 = vmatprep.subr.bf16.mxu0 0
          %1246 = vmatpush1.bf16.msra.mxu0 %v1222
          %1247 = vmatprep.subr.bf16.mxu0 0
          %1248 = vmatpush1.bf16.msra.mxu0 0
          %1249 = vmatprep.subr.bf16.mxu0 0
          %1250 = vmatpush1.bf16.msra.mxu0 0
          %1251 = vmatprep.subr.bf16.mxu0 0
          %1252 = vmatpush1.bf16.msra.mxu0 0
          %1253 = vmatprep.subr.bf16.mxu0 0
          %1254 = vmatpush1.bf16.msra.mxu0 0
          %1255 = vmatprep.subr.bf16.mxu0 0
          %1256 = vmatpush1.bf16.msra.mxu0 0
          %1257 = vmatprep.subr.bf16.mxu0 0
          %1258 = vmatpush1.bf16.msra.mxu0 0
          %1259 = vmatprep.subr.bf16.mxu0 0
          %1260 = vmatpush1.bf16.msra.mxu0 0
          %1261 = vmatprep.subr.bf16.mxu0 0
          %1262 = vmatpush1.bf16.msra.mxu0 0
          %1263 = vmatprep.mubr.bf16.mxu0 0
          %1264 = vmatmul.mubr.bf16.gmra.mrb[0].mxu0 %v909
          %v1265 = vpop.f32.mrb[0].mxu0
          %v1266 = vadd.f32 %v1181, %v1265
          %v1267 = vpop.f32.mrb[0].mxu0
          %v1268 = vpop.f32.mrb[0].mxu0
          %v1269 = vpop.f32.mrb[0].mxu0
          %1270 = vdwg.mxu0
          %v1271 = vmin.f32 %v1153, 12.0
          %v1272 = vmul.f32 %v1271, 1.442695
          %v1273 = vpow.pop %v1272
          %1274 = vst [vmem:[%s649] sm:$0xff] %v1273
          %s1275 = scalar_lea.vmem %s649, 8 [#allocation16]
          %1276 = vst [vmem:[%s1275] sm:$0xff] %v1266
        $region118: #{tpu_custom_call.1} parent=89 // pred_fallthru
          _
        %p1277 = scmp.eq.s32.totalorder %s41, 1
        // Predicated region
        $region119: #{tpu_custom_call.1} parent=89 // pred_check
          %p1278 = pneg %p1277
        $region120: #{tpu_custom_call.1} parent=89 // pred_check_branch
          %1280 = sbr.rel (%p1278) target = $region122
        $region121: #{tpu_custom_call.1} parent=89 // pred_region
          %v1281 = vld [vmem:[%s566] sm:$0xf]
          %v1282 = vld [vmem:[%s566 + $0x4] sm:$0xf]
          %v1283 = vld [vmem:[%s566 + $0x8] sm:$0xf]
          %v1284 = vld [vmem:[%s566 + $0xc] sm:$0xf]
          %v1285 = vld [vmem:[%s566 + $0x10] sm:$0xf]
          %v1286 = vld [vmem:[%s566 + $0x14] sm:$0xf]
          %v1287 = vld [vmem:[%s566 + $0x18] sm:$0xf]
          %v1288 = vld [vmem:[%s566 + $0x1c] sm:$0xf]
          %v1289 = vld [vmem:[%s566 + $0x20] sm:$0xf]
          %v1290 = vld [vmem:[%s566 + $0x24] sm:$0xf]
          %v1291 = vld [vmem:[%s566 + $0x28] sm:$0xf]
          %v1292 = vld [vmem:[%s566 + $0x2c] sm:$0xf]
          %v1293 = vld [vmem:[%s566 + $0x30] sm:$0xf]
          %v1294 = vld [vmem:[%s566 + $0x34] sm:$0xf]
          %v1295 = vld [vmem:[%s566 + $0x38] sm:$0xf]
          %v1296 = vld [vmem:[%s566 + $0x3c] sm:$0xf]
          %v1297 = vld [vmem:[%s663] sm:$0x1]
          %v1299 = vlaneseq
          %v1300 = vshrl.u32 %v1299, 7
          %v1301 = vsub.s32 0, %v1300
          %v1302 = vrot.slane %v1297, %v1301
          %v1320 = vunpack.c.l.b16 %v1281
          %v1321 = vunpack.c.l.b16 %v1282
          %v1322 = vunpack.c.l.b16 %v1283
          %v1323 = vunpack.c.l.b16 %v1284
          %v1324 = vunpack.c.l.b16 %v1285
          %v1325 = vunpack.c.l.b16 %v1286
          %v1326 = vunpack.c.l.b16 %v1287
          %v1327 = vunpack.c.l.b16 %v1288
          %v1328 = vunpack.c.l.b16 %v1289
          %v1329 = vunpack.c.l.b16 %v1290
          %v1330 = vunpack.c.l.b16 %v1291
          %v1331 = vunpack.c.l.b16 %v1292
          %v1332 = vunpack.c.l.b16 %v1293
          %v1333 = vunpack.c.l.b16 %v1294
          %v1334 = vunpack.c.l.b16 %v1295
          %v1335 = vunpack.c.l.b16 %v1296
          %v1336 = vpack.c.b16 %v1321, %v1320
          %v1337 = vpack.c.b16 %v1323, %v1322
          %v1338 = vpack.c.b16 %v1325, %v1324
          %v1339 = vpack.c.b16 %v1327, %v1326
          %v1340 = vpack.c.b16 %v1329, %v1328
          %v1341 = vpack.c.b16 %v1331, %v1330
          %v1342 = vpack.c.b16 %v1333, %v1332
          %v1343 = vpack.c.b16 %v1335, %v1334
          %1352 = vmatprep.subr.bf16.mxu0 0
          %1353 = vmatpush1.bf16.msra.mxu0 %v1336
          %1354 = vmatprep.subr.bf16.mxu0 0
          %1355 = vmatpush1.bf16.msra.mxu0 %v1337
          %1356 = vmatprep.subr.bf16.mxu0 0
          %1357 = vmatpush1.bf16.msra.mxu0 %v1338
          %1358 = vmatprep.subr.bf16.mxu0 0
          %1359 = vmatpush1.bf16.msra.mxu0 %v1339
          %1360 = vmatprep.subr.bf16.mxu0 0
          %1361 = vmatpush1.bf16.msra.mxu0 %v1340
          %1362 = vmatprep.subr.bf16.mxu0 0
          %1363 = vmatpush1.bf16.msra.mxu0 %v1341
          %1364 = vmatprep.subr.bf16.mxu0 0
          %1365 = vmatpush1.bf16.msra.mxu0 %v1342
          %1366 = vmatprep.subr.bf16.mxu0 0
          %1367 = vmatpush1.bf16.msra.mxu0 %v1343
          %1368 = vmatprep.subr.bf16.mxu0 0
          %1369 = vmatpush1.bf16.msra.mxu0 0
          %1370 = vmatprep.subr.bf16.mxu0 0
          %1371 = vmatpush1.bf16.msra.mxu0 0
          %1372 = vmatprep.subr.bf16.mxu0 0
          %1373 = vmatpush1.bf16.msra.mxu0 0
          %1374 = vmatprep.subr.bf16.mxu0 0
          %1375 = vmatpush1.bf16.msra.mxu0 0
          %1376 = vmatprep.subr.bf16.mxu0 0
          %1377 = vmatpush1.bf16.msra.mxu0 0
          %1378 = vmatprep.subr.bf16.mxu0 0
          %1379 = vmatpush1.bf16.msra.mxu0 0
          %1380 = vmatprep.subr.bf16.mxu0 0
          %1381 = vmatpush1.bf16.msra.mxu0 0
          %1382 = vmatprep.subr.bf16.mxu0 0
          %1383 = vmatpush1.bf16.msra.mxu0 0
          %1384 = vmatprep.mubr.bf16.mxu0 0
          %1385 = vmatmul.mubr.bf16.gmra.mrb[0].mxu0 %v909
          %v1386 = vpop.f32.mrb[0].mxu0
          %v1387 = vadd.f32 %v1302, %v1386
          %v1388 = vpop.f32.mrb[0].mxu0
          %v1389 = vpop.f32.mrb[0].mxu0
          %v1390 = vpop.f32.mrb[0].mxu0
          %1391 = vdwg.mxu0
          %v1392 = vld [vmem:[#allocation5] sm:$0xff]
          %v1393 = vrcp.pop %v1392
          %v1394 = vld [vmem:[#allocation4] sm:$0xff]
          %1396 = vset.pattern.permute.xlu0 0
          %1397 = vperm.xlu0 %1396, %v1394
          %v1398 = vpop.permute.xlu0 %1397
          %v1400 = vsub.f32 %v1387, %v1398
          %v1401 = vmul.f32 %v1400, 1.442695
          %v1402 = vpow.pop %v1401
          %1404 = vset.pattern.permute.xlu0 0
          %1405 = vperm.xlu0 %1404, %v1393
          %v1406 = vpop.permute.xlu0 %1405
          %v1408 = vmul.f32 %v1402, %v1406
          %1409 = vst [vmem:[%s642] sm:$0xff] %v1408
          %v1410 = vld [vmem:[#allocation3] sm:$0xff]
          %1412 = vset.pattern.permute.xlu0 0
          %1413 = vperm.xlu0 %1412, %v1410
          %v1414 = vpop.permute.xlu0 %1413
          %v1416 = vmul.f32 %v1414, %v1408
          %s1417 = scalar_lea.vmem %s642, 8 [#allocation15]
          %1418 = vst [vmem:[%s1417] sm:$0xff] %v1416
        $region122: #{tpu_custom_call.1} parent=89 // pred_fallthru
          _
        %s1419 = sand.u32 %s318, 1
        %s1420 = scalar_lea.sflag [#allocation8], %s1419
        %s1421 = sand.u32 %s318, 1
        %s1422 = smul.addr %s1421, 16
        %s1423 = scalar_lea.vmem [#allocation15], %s1422
        %s1424 = sand.u32 %s35, 1
        %s1425 = scalar_lea.sflag [#allocation17], %s1424
        %s1426 = sand.u32 %s352, 1
        %s1427 = smul.addr %s1426, 16
        %s1428 = scalar_lea.vmem [#allocation16], %s1427
        %s1429 = sand.u32 %s35, 1
        %s1430 = scalar_lea.sflag [#allocation17], %s1429
        %s1431 = sand.u32 %s378, 1
        %s1432 = smul.addr %s1431, 8
        %s1433 = scalar_lea.vmem [#allocation18], %s1432
        // Predicated region
        $region123: #{tpu_custom_call.1} parent=89 // pred_check
          %p1434 = pneg %p328
        $region124: #{tpu_custom_call.1} parent=89 // pred_check_branch
          %1436 = sbr.rel (%p1434) target = $region126
        $region125: #{tpu_custom_call.1} parent=89 // pred_region
          %s1437 = smul.u32 %s42, %s41
          %s1439 = ssub.s32 256, 256
          %1440 = vsyncadd %s1420, %s1439
          %s1441 = smul.addr %s40, 2
          %s1442 = sadd.s32 %s1437, %s1441
          %s1443 = smul.addr %s1442, 128
          %s1444 = scalar_lea.hbm %s10, %s1443
          %s1445 = sshll.u32 %s1423, 4
          %s1446 = int_to_ptr.vmem [resolvable:$true] %s1445
          %1451 = dma.vmem_to_hbm [thread:$0]  %s1446, 256, %s1444, %s1420, 128, 512, 8
        $region126: #{tpu_custom_call.1} parent=89 // pred_fallthru
          _
        // Predicated region
        $region127: #{tpu_custom_call.1} parent=89 // pred_check
          %p1452 = pneg %p362
        $region128: #{tpu_custom_call.1} parent=89 // pred_check_branch
          %1454 = sbr.rel (%p1452) target = $region130
        $region129: #{tpu_custom_call.1} parent=89 // pred_region
          %s1455 = ssub.s32 1, %s41
          %s1456 = smul.u32 %s42, %s1455
          %s1457 = sadd.s32 %s1456, %s41
          %s1459 = ssub.s32 256, 256
          %1460 = vsyncadd %s1425, %s1459
          %s1461 = smul.addr %s40, 2
          %s1462 = sadd.s32 %s1457, %s1461
          %s1463 = smul.addr %s1462, 128
          %s1464 = scalar_lea.hbm %s11, %s1463
          %s1465 = sshll.u32 %s1428, 4
          %s1466 = int_to_ptr.vmem [resolvable:$true] %s1465
          %1471 = dma.vmem_to_hbm [thread:$0]  %s1466, 256, %s1464, %s1425, 128, 512, 8
        $region130: #{tpu_custom_call.1} parent=89 // pred_fallthru
          _
        // Predicated region
        $region131: #{tpu_custom_call.1} parent=89 // pred_check
          %p1472 = pneg %p388
        $region132: #{tpu_custom_call.1} parent=89 // pred_check_branch
          %1474 = sbr.rel (%p1472) target = $region134
        $region133: #{tpu_custom_call.1} parent=89 // pred_region
          %s1476 = ssub.s32 128, 128
          %1477 = vsyncadd %s1430, %s1476
          %s1478 = smul.addr %s40, 128
          %s1479 = scalar_lea.hbm %s12, %s1478
          %s1481 = sshll.u32 %s1433, 4
          %s1482 = int_to_ptr.vmem [resolvable:$true] %s1481
          %1484 = dma.vmem_to_hbm [thread:$0]  %s1482, 128, %s1479, %s1430
        $region134: #{tpu_custom_call.1} parent=89 // pred_fallthru
          _
      $region90: #{tpu_custom_call.1} parent=5 // pred_fallthru
        _
      %p1485 = scmp.le.s32.totalorder 2, %s30
      // Predicated region
      $region135: #{tpu_custom_call.1} parent=5 // pred_check
        %p1486 = pneg %p1485
      $region136: #{tpu_custom_call.1} parent=5 // pred_check_branch
        %1488 = sbr.rel (%p1486) target = $region138
      $region137: #{tpu_custom_call.1} parent=5 // pred_region
        %s1489 = ssub.s32 %s30, 2
        // Predicated region
        $region139: #{tpu_custom_call.1} parent=137 // pred_check
          %p1490 = pneg %p334
        $region140: #{tpu_custom_call.1} parent=137 // pred_check_branch
          %1492 = sbr.rel (%p1490) target = $region142
        $region141: #{tpu_custom_call.1} parent=137 // pred_region
          %s1493 = sand.u32 %s319, 1
          %s1494 = scalar_lea.sflag [#allocation8], %s1493
          %s1495 = sand.u32 %s319, 1
          %s1496 = smul.addr %s1495, 16
          %s1497 = scalar_lea.vmem [#allocation15], %s1496
          %1498 = dma.done %s1494, 256
        $region142: #{tpu_custom_call.1} parent=137 // pred_fallthru
          _
        // Predicated region
        $region143: #{tpu_custom_call.1} parent=137 // pred_check
          %p1499 = pneg %p368
        $region144: #{tpu_custom_call.1} parent=137 // pred_check_branch
          %1501 = sbr.rel (%p1499) target = $region146
        $region145: #{tpu_custom_call.1} parent=137 // pred_region
          %s1502 = sand.u32 %s36, 1
          %s1503 = scalar_lea.sflag [#allocation17], %s1502
          %s1504 = sand.u32 %s353, 1
          %s1505 = smul.addr %s1504, 16
          %s1506 = scalar_lea.vmem [#allocation16], %s1505
          %1507 = dma.done %s1503, 256
        $region146: #{tpu_custom_call.1} parent=137 // pred_fallthru
          _
        // Predicated region
        $region147: #{tpu_custom_call.1} parent=137 // pred_check
          %p1508 = pneg %p394
        $region148: #{tpu_custom_call.1} parent=137 // pred_check_branch
          %1510 = sbr.rel (%p1508) target = $region150
        $region149: #{tpu_custom_call.1} parent=137 // pred_region
          %s1511 = sand.u32 %s36, 1
          %s1512 = scalar_lea.sflag [#allocation17], %s1511
          %s1513 = sand.u32 %s379, 1
          %s1514 = smul.addr %s1513, 8
          %s1515 = scalar_lea.vmem [#allocation18], %s1514
          %1516 = dma.done %s1512, 128
        $region150: #{tpu_custom_call.1} parent=137 // pred_fallthru
          _
      $region138: #{tpu_custom_call.1} parent=5 // pred_fallthru
        _
    $region6: #{tpu_custom_call.1} parent=1 // loop_footer
      %s34 = sadd.s32 1, %s30
    $region7: #{tpu_custom_call.1} parent=1 // loop_footer_branch
      %29 = sbr.rel target = $region3
    $region8: #{tpu_custom_call.1} parent=1 // loop_exit
      _
    %1517 = vsyncpa [#allocation7], 1
    %s1518 = scalar_lea.sflag [#allocation7], 1
    %1519 = vsyncpa %s1518, 1
    %1520 = vsyncpa [#allocation10], 1
    %s1521 = scalar_lea.sflag [#allocation10], 1
    %1522 = vsyncpa %s1521, 1
    %1523 = vsyncpa [#allocation14], 1
    %1524 = vsyncpa [#allocation8], 1
    %s1525 = scalar_lea.sflag [#allocation8], 1
    %1526 = vsyncpa %s1525, 1
    %1527 = vsyncpa [#allocation17], 1
    %s1528 = scalar_lea.sflag [#allocation17], 1
    %1529 = vsyncpa %s1528, 1

</llo_original>
